<compile_context>
chip_gen: v7x
topology: tpu7x:2x2x1
jax: 0.10.0
libtpu: 0.0.40
codegen_flags: <defaults>
</compile_context>

<pallas_src>
import math

import jax
import jax.numpy as jnp
from jax import lax
from jax.experimental import pallas as pl
from jax.experimental.pallas import tpu as pltpu


def _round_up(v: int, m: int) -> int:
    return ((v + m - 1) // m) * m


def gcn_kernel(a_ref, xs_ref, dis_ref, w1_ref, b1_ref, w2_ref, b2_ref,
               h_ref, z_ref, acc_ref):
    # a_ref  : (TM, TK)  bf16 adjacency tile (with self-loops, unnormalized)
    # xs_ref : (TK, Fp)  bf16 pre-scaled features  D^{-1/2} X
    # dis_ref: (TM, 1)   f32  D^{-1/2} for this row block
    # w1/b1  : (Fp, Hp) / (1, Hp)   GCNConv weight / bias (resident)
    # w2/b2  : (Hp, Cp) / (1, Cp)   Linear head weight / bias (resident)
    # acc_ref: (TM, Fp)  f32 accumulator scratch
    k = pl.program_id(1)

    @pl.when(k == 0)
    def _():
        acc_ref[...] = jnp.zeros_like(acc_ref)

    # Stream:  acc += A[i, k] @ (D^{-1/2} X)[k]   (bf16 operands, f32 accumulate)
    acc_ref[...] += jnp.dot(a_ref[...], xs_ref[...],
                            preferred_element_type=jnp.float32)

    @pl.when(k == pl.num_programs(1) - 1)
    def _():
        # Finish this row block: second D^{-1/2} scale, transform, bias, ReLU, head.
        agg = dis_ref[...] * acc_ref[...]                       # (TM, Fp) f32
        h = jnp.dot(agg, w1_ref[...],
                    preferred_element_type=jnp.float32) + b1_ref[...]
        h = jnp.maximum(h, 0.0)
        h_ref[...] = h.astype(h_ref.dtype)
        z_ref[...] = (jnp.dot(h, w2_ref[...],
                              preferred_element_type=jnp.float32)
                      + b2_ref[...]).astype(z_ref.dtype)


def gcn_forward(a_dense, x, w1, b1, w2, b2, *, tm=256, tk=512):
    """a_dense: (N, N) dense adjacency WITH self-loops already added."""
    n, f = x.shape
    hdim = w1.shape[1]
    cdim = w2.shape[1]
    lane = 128

    # ---- geometry: pad lane dims to 128, rows/cols of A to the tile grid ----
    fp = _round_up(f, lane)
    hp = _round_up(hdim, lane)
    cp = _round_up(cdim, lane)

    np0 = _round_up(n, lane)
    tm = min(tm, np0)
    tk = min(tk, np0)
    assert tm % 8 == 0 and tk % lane == 0
    np_ = _round_up(n, math.lcm(tm, tk))
    grid = (np_ // tm, np_ // tk)

    # ---- plain-JAX glue: padding, degree, D^{-1/2}, dtype casts -------------
    a_p = jnp.zeros((np_, np_), jnp.float32).at[:n, :n].set(
        a_dense.astype(jnp.float32))
    deg = jnp.sum(a_p, axis=1, keepdims=True)                      # (Np, 1)
    d_inv_sqrt = jnp.where(deg > 0.0,
                           lax.rsqrt(jnp.maximum(deg, 1e-30)),
                           0.0).astype(jnp.float32)                 # inf -> 0 guard

    x_p = jnp.zeros((np_, fp), jnp.float32).at[:n, :f].set(x.astype(jnp.float32))
    xs = (d_inv_sqrt * x_p).astype(jnp.bfloat16)    # D^{-1/2} X stream (bf16)
    a_bf = a_p.astype(jnp.bfloat16)                 # 0/1 entries: exact in bf16

    w1_p = jnp.zeros((fp, hp), jnp.float32).at[:f, :hdim].set(w1)
    b1_p = jnp.zeros((1, hp), jnp.float32).at[:, :hdim].set(b1.reshape(1, -1))
    w2_p = jnp.zeros((hp, cp), jnp.float32).at[:hdim, :cdim].set(w2)
    b2_p = jnp.zeros((1, cp), jnp.float32).at[:, :cdim].set(b2.reshape(1, -1))

    h_pad, z_pad = pl.pallas_call(
        gcn_kernel,
        out_shape=(
            jax.ShapeDtypeStruct((np_, hp), jnp.float32),
            jax.ShapeDtypeStruct((np_, cp), jnp.float32),
        ),
        grid_spec=pltpu.PrefetchScalarGridSpec(
            num_scalar_prefetch=0,
            grid=grid,
            in_specs=[
                pl.BlockSpec((tm, tk), lambda i, k: (i, k)),    # A stream (bf16)
                pl.BlockSpec((tk, fp), lambda i, k: (k, 0)),    # D^{-1/2} X (bf16)
                pl.BlockSpec((tm, 1), lambda i, k: (i, 0)),     # D^{-1/2} row scale
                pl.BlockSpec((fp, hp), lambda i, k: (0, 0)),    # W1 (resident)
                pl.BlockSpec((1, hp), lambda i, k: (0, 0)),     # b1 (resident)
                pl.BlockSpec((hp, cp), lambda i, k: (0, 0)),    # W2 (resident)
                pl.BlockSpec((1, cp), lambda i, k: (0, 0)),     # b2 (resident)
            ],
            out_specs=(
                pl.BlockSpec((tm, hp), lambda i, k: (i, 0)),
                pl.BlockSpec((tm, cp), lambda i, k: (i, 0)),
            ),
            scratch_shapes=[pltpu.VMEM((tm, fp), jnp.float32)],
        ),
        compiler_params=pltpu.CompilerParams(
            dimension_semantics=("parallel", "arbitrary"),
        ),
    )(a_bf, xs, d_inv_sqrt, w1_p, b1_p, w2_p, b2_p)

    return h_pad[:n, :hdim], z_pad[:n, :cdim]


def build_adjacency(edge_index, num_nodes):
    """Dense adjacency from edge_index [2, E] with self-loops (plain JAX glue)."""
    src, dst = edge_index[0], edge_index[1]
    a = jnp.zeros((num_nodes, num_nodes), dtype=jnp.float32)
    a = a.at[src, dst].set(1.0)
    a = a + jnp.eye(num_nodes, dtype=jnp.float32)      # self-loops
    return a


if __name__ == "__main__":
    # Small synthetic shapes consistent with the module
    N_NODES = 200         # number of graph nodes (exercises a 2x2 tile grid + padding)
    NUM_FEATURES = 8      # data.num_features
    HIDDEN = 32           # hidden_channels
    NUM_CLASSES = 8       # len(label_mapping)

    key = jax.random.PRNGKey(0)
    k_x, k_w1, k_b1, k_w2, k_b2 = jax.random.split(key, 5)

    # Node features
    x = jax.random.normal(k_x, (N_NODES, NUM_FEATURES), dtype=jnp.float32)

    # Deterministic edge_index: bidirectional ring + a few chords
    idx = jnp.arange(N_NODES, dtype=jnp.int32)
    ring_src = jnp.concatenate([idx, (idx + 1) % N_NODES])
    ring_dst = jnp.concatenate([(idx + 1) % N_NODES, idx])
    chord_src = jnp.concatenate([idx, (idx + 4) % N_NODES])
    chord_dst = jnp.concatenate([(idx + 4) % N_NODES, idx])
    edge_index = jnp.stack(
        [jnp.concatenate([ring_src, chord_src]),
         jnp.concatenate([ring_dst, chord_dst])], axis=0
    )  # [2, E]

    a_dense = build_adjacency(edge_index, N_NODES)

    # Deterministic parameter init (glorot-ish weights, small/zero biases)
    w1 = jax.random.normal(k_w1, (NUM_FEATURES, HIDDEN), dtype=jnp.float32) * (
        1.0 / jnp.sqrt(NUM_FEATURES)
    )
    b1 = jnp.zeros((1, HIDDEN), dtype=jnp.float32)
    w2 = jax.random.normal(k_w2, (HIDDEN, NUM_CLASSES), dtype=jnp.float32) * (
        1.0 / jnp.sqrt(HIDDEN)
    )
    b2 = jax.random.normal(k_b2, (1, NUM_CLASSES), dtype=jnp.float32) * 0.01

    h, z = gcn_forward(a_dense, x, w1, b1, w2, b2, tm=128, tk=128)
    jax.block_until_ready((h, z))
    assert h.shape == (N_NODES, HIDDEN) and z.shape == (N_NODES, NUM_CLASSES)

    # Reference 1: mirrors the kernel's bf16 streaming of D^{-1/2} X (tight check)
    deg = jnp.sum(a_dense, axis=1, keepdims=True)
    dinv = 1.0 / jnp.sqrt(deg)
    xs_ref = (dinv * x).astype(jnp.bfloat16).astype(jnp.float32)
    agg_ref = dinv * (a_dense @ xs_ref)
    h_ref = jnp.maximum(agg_ref @ w1 + b1, 0.0)
    z_ref = h_ref @ w2 + b2
    assert jnp.allclose(h, h_ref, atol=1e-2, rtol=1e-2), "h mismatch (bf16 path)"
    assert jnp.allclose(z, z_ref, atol=1e-2, rtol=1e-2), "z mismatch (bf16 path)"

    # Reference 2: pure-f32 module semantics (looser, bf16 stream tolerance)
    a_hat = dinv * a_dense * dinv.T
    h_f32 = jnp.maximum(a_hat @ (x @ w1) + b1, 0.0)
    z_f32 = h_f32 @ w2 + b2
    assert jnp.allclose(h, h_f32, atol=5e-2, rtol=5e-2), "h mismatch (f32 ref)"
    assert jnp.allclose(z, z_f32, atol=5e-2, rtol=5e-2), "z mismatch (f32 ref)"

    print("KERNEL_OK")
</pallas_src>

<mosaic_0001>
module attributes {stable_mosaic.version = 11 : i64} {
  func.func @gcn_kernel(%arg0: i32, %arg1: i32, %arg2: memref<128x128xbf16, #tpu.memory_space<vmem>>, %arg3: memref<128x128xbf16, #tpu.memory_space<vmem>>, %arg4: memref<128x1xf32, #tpu.memory_space<vmem>>, %arg5: memref<128x128xf32, #tpu.memory_space<vmem>>, %arg6: memref<1x128xf32, #tpu.memory_space<vmem>>, %arg7: memref<128x128xf32, #tpu.memory_space<vmem>>, %arg8: memref<1x128xf32, #tpu.memory_space<vmem>>, %arg9: memref<128x128xf32, #tpu.memory_space<vmem>>, %arg10: memref<128x128xf32, #tpu.memory_space<vmem>>, %arg11: memref<128x128xf32, #tpu.memory_space<vmem>>) attributes {dimension_semantics = [#tpu.dimension_semantics<parallel>, #tpu.dimension_semantics<arbitrary>], iteration_bounds = array<i64: 2, 2>, scalar_prefetch = 0 : i64, scratch_operands = 1 : i64, tpu.core_type = #tpu.core_type<tc>, window_params = [{transform_indices = @transform_0, window_bounds = array<i64: 128, 128>}, {transform_indices = @transform_1, window_bounds = array<i64: 128, 128>}, {transform_indices = @transform_2, window_bounds = array<i64: 128, 1>}, {pipeline_mode = #tpu.pipeline_mode<synchronous>, transform_indices = @transform_3, window_bounds = array<i64: 128, 128>}, {pipeline_mode = #tpu.pipeline_mode<synchronous>, transform_indices = @transform_4, window_bounds = array<i64: 1, 128>}, {pipeline_mode = #tpu.pipeline_mode<synchronous>, transform_indices = @transform_5, window_bounds = array<i64: 128, 128>}, {pipeline_mode = #tpu.pipeline_mode<synchronous>, transform_indices = @transform_6, window_bounds = array<i64: 1, 128>}, {transform_indices = @transform_7, window_bounds = array<i64: 128, 128>}, {transform_indices = @transform_8, window_bounds = array<i64: 128, 128>}]} {
    %c0_i32 = arith.constant 0 : i32
    %0 = arith.cmpi eq, %arg1, %c0_i32 : i32
    %1 = arith.extui %0 : i1 to i32
    %c0_i32_0 = arith.constant 0 : i32
    %2 = arith.cmpi ne, %1, %c0_i32_0 : i32
    scf.if %2 {
      %cst_9 = arith.constant 0.000000e+00 : f32
      %12 = vector.broadcast %cst_9 : f32 to vector<128x128xf32>
      %c0_10 = arith.constant 0 : index
      %c0_11 = arith.constant 0 : index
      %13 = vector.load %arg11[%c0_10, %c0_11] : memref<128x128xf32, #tpu.memory_space<vmem>>, vector<128x128xf32>
      tpu.vector_store %arg11[%c0_10, %c0_11], %12 {strides = array<i32>} : memref<128x128xf32, #tpu.memory_space<vmem>>, vector<128x128xf32>,
    } else {
    }
    %c0 = arith.constant 0 : index
    %c0_1 = arith.constant 0 : index
    %3 = vector.load %arg11[%c0, %c0_1] : memref<128x128xf32, #tpu.memory_space<vmem>>, vector<128x128xf32>
    %c0_2 = arith.constant 0 : index
    %c0_3 = arith.constant 0 : index
    %4 = vector.load %arg2[%c0_2, %c0_3] : memref<128x128xbf16, #tpu.memory_space<vmem>>, vector<128x128xbf16>
    %c0_4 = arith.constant 0 : index
    %c0_5 = arith.constant 0 : index
    %5 = vector.load %arg3[%c0_4, %c0_5] : memref<128x128xbf16, #tpu.memory_space<vmem>>, vector<128x128xbf16>
    %cst = arith.constant dense<0.000000e+00> : vector<128x128xf32>
    %6 = tpu.matmul %4, %5, %cst {dimension_numbers = #tpu.dot_dimension_numbers<[1], [0], [0], [1], [0, 0, 1, 1], [], []>} : vector<128x128xbf16>, vector<128x128xbf16>, vector<128x128xf32> -> vector<128x128xf32>
    %7 = arith.addf %3, %6 : vector<128x128xf32>
    %c0_6 = arith.constant 0 : index
    %c0_7 = arith.constant 0 : index
    %8 = vector.load %arg11[%c0_6, %c0_7] : memref<128x128xf32, #tpu.memory_space<vmem>>, vector<128x128xf32>
    tpu.vector_store %arg11[%c0_6, %c0_7], %7 {strides = array<i32>} : memref<128x128xf32, #tpu.memory_space<vmem>>, vector<128x128xf32>,
    %c1_i32 = arith.constant 1 : i32
    %9 = arith.cmpi eq, %arg1, %c1_i32 : i32
    %10 = arith.extui %9 : i1 to i32
    %c0_i32_8 = arith.constant 0 : i32
    %11 = arith.cmpi ne, %10, %c0_i32_8 : i32
    scf.if %11 {
      %c0_9 = arith.constant 0 : index
      %c0_10 = arith.constant 0 : index
      %12 = vector.load %arg4[%c0_9, %c0_10] : memref<128x1xf32, #tpu.memory_space<vmem>>, vector<128x1xf32>
      %c0_11 = arith.constant 0 : index
      %c0_12 = arith.constant 0 : index
      %13 = vector.load %arg11[%c0_11, %c0_12] : memref<128x128xf32, #tpu.memory_space<vmem>>, vector<128x128xf32>
      %14 = vector.broadcast %12 : vector<128x1xf32> to vector<128x128xf32>
      %15 = arith.mulf %14, %13 : vector<128x128xf32>
      %c0_13 = arith.constant 0 : index
      %c0_14 = arith.constant 0 : index
      %16 = vector.load %arg5[%c0_13, %c0_14] : memref<128x128xf32, #tpu.memory_space<vmem>>, vector<128x128xf32>
      %cst_15 = arith.constant dense<0.000000e+00> : vector<128x128xf32>
      %17 = tpu.matmul %15, %16, %cst_15 {dimension_numbers = #tpu.dot_dimension_numbers<[1], [0], [0], [1], [0, 0, 1, 1], [], []>} : vector<128x128xf32>, vector<128x128xf32>, vector<128x128xf32> -> vector<128x128xf32>
      %c0_16 = arith.constant 0 : index
      %c0_17 = arith.constant 0 : index
      %18 = vector.load %arg6[%c0_16, %c0_17] : memref<1x128xf32, #tpu.memory_space<vmem>>, vector<1x128xf32>
      %19 = vector.broadcast %18 : vector<1x128xf32> to vector<128x128xf32>
      %20 = arith.addf %17, %19 : vector<128x128xf32>
      %cst_18 = arith.constant 0.000000e+00 : f32
      %21 = vector.broadcast %cst_18 : f32 to vector<128x128xf32>
      %22 = arith.maximumf %20, %21 : vector<128x128xf32>
      %c0_19 = arith.constant 0 : index
      %c0_20 = arith.constant 0 : index
      %23 = vector.load %arg9[%c0_19, %c0_20] : memref<128x128xf32, #tpu.memory_space<vmem>>, vector<128x128xf32>
      tpu.vector_store %arg9[%c0_19, %c0_20], %22 {strides = array<i32>} : memref<128x128xf32, #tpu.memory_space<vmem>>, vector<128x128xf32>,
      %c0_21 = arith.constant 0 : index
      %c0_22 = arith.constant 0 : index
      %24 = vector.load %arg7[%c0_21, %c0_22] : memref<128x128xf32, #tpu.memory_space<vmem>>, vector<128x128xf32>
      %cst_23 = arith.constant dense<0.000000e+00> : vector<128x128xf32>
      %25 = tpu.matmul %22, %24, %cst_23 {dimension_numbers = #tpu.dot_dimension_numbers<[1], [0], [0], [1], [0, 0, 1, 1], [], []>} : vector<128x128xf32>, vector<128x128xf32>, vector<128x128xf32> -> vector<128x128xf32>
      %c0_24 = arith.constant 0 : index
      %c0_25 = arith.constant 0 : index
      %26 = vector.load %arg8[%c0_24, %c0_25] : memref<1x128xf32, #tpu.memory_space<vmem>>, vector<1x128xf32>
      %27 = vector.broadcast %26 : vector<1x128xf32> to vector<128x128xf32>
      %28 = arith.addf %25, %27 : vector<128x128xf32>
      %c0_26 = arith.constant 0 : index
      %c0_27 = arith.constant 0 : index
      %29 = vector.load %arg10[%c0_26, %c0_27] : memref<128x128xf32, #tpu.memory_space<vmem>>, vector<128x128xf32>
      tpu.vector_store %arg10[%c0_26, %c0_27], %28 {strides = array<i32>} : memref<128x128xf32, #tpu.memory_space<vmem>>, vector<128x128xf32>,
    } else {
    }
    return
  }
  func.func @transform_0(%arg0: i32, %arg1: i32) -> (i32, i32) {
    %c0_i32 = arith.constant 0 : i32
    return %arg0, %arg1 : i32, i32
  }
  func.func @transform_1(%arg0: i32, %arg1: i32) -> (i32, i32) {
    %c0_i32 = arith.constant 0 : i32
    %c0_i32_0 = arith.constant 0 : i32
    return %arg1, %c0_i32 : i32, i32
  }
  func.func @transform_2(%arg0: i32, %arg1: i32) -> (i32, i32) {
    %c0_i32 = arith.constant 0 : i32
    %c0_i32_0 = arith.constant 0 : i32
    return %arg0, %c0_i32 : i32, i32
  }
  func.func @transform_3(%arg0: i32, %arg1: i32) -> (i32, i32) {
    %c0_i32 = arith.constant 0 : i32
    %c0_i32_0 = arith.constant 0 : i32
    %c0_i32_1 = arith.constant 0 : i32
    return %c0_i32, %c0_i32_0 : i32, i32
  }
  func.func @transform_4(%arg0: i32, %arg1: i32) -> (i32, i32) {
    %c0_i32 = arith.constant 0 : i32
    %c0_i32_0 = arith.constant 0 : i32
    %c0_i32_1 = arith.constant 0 : i32
    return %c0_i32, %c0_i32_0 : i32, i32
  }
  func.func @transform_5(%arg0: i32, %arg1: i32) -> (i32, i32) {
    %c0_i32 = arith.constant 0 : i32
    %c0_i32_0 = arith.constant 0 : i32
    %c0_i32_1 = arith.constant 0 : i32
    return %c0_i32, %c0_i32_0 : i32, i32
  }
  func.func @transform_6(%arg0: i32, %arg1: i32) -> (i32, i32) {
    %c0_i32 = arith.constant 0 : i32
    %c0_i32_0 = arith.constant 0 : i32
    %c0_i32_1 = arith.constant 0 : i32
    return %c0_i32, %c0_i32_0 : i32, i32
  }
  func.func @transform_7(%arg0: i32, %arg1: i32) -> (i32, i32) {
    %c0_i32 = arith.constant 0 : i32
    %c0_i32_0 = arith.constant 0 : i32
    return %arg0, %c0_i32 : i32, i32
  }
  func.func @transform_8(%arg0: i32, %arg1: i32) -> (i32, i32) {
    %c0_i32 = arith.constant 0 : i32
    %c0_i32_0 = arith.constant 0 : i32
    return %arg0, %c0_i32 : i32, i32
  }
}

</mosaic_0001>

<llo_original>
// kernel: tpu_custom_call.1
$region0: #{tpu_custom_call.1}
  #allocation0 [shape = 'u32[]', space=smem, size = 0x4, offset = 0x4, fixed_abs, tag = 'smem constant byte address 0x4 - core index']
  #allocation1 [shape = 'u32[144,128]{1,0:T(1,128)}', space=vmem, size = 0x12000, scoped, tag = 'internal scratch']
  #allocation2 [shape = 'f32[128,128]{1,0:T(8,128)}', space=vmem, size = 0x10000, scoped, tag = 'scratch operand']
  %s0 = inlined_call_operand.vmem [shape: bf16[256,256], index: 0, kind: input, shape index: {}]
  %s1 = inlined_call_operand.hbm [shape: bf16[256,128], index: 1, kind: input, shape index: {}]
  %s2 = inlined_call_operand.vmem [shape: f32[256,1], index: 2, kind: input, shape index: {}]
  %s3 = inlined_call_operand.hbm [shape: f32[128,128], index: 3, kind: input, shape index: {}]
  %s4 = inlined_call_operand.vmem [shape: f32[1,128], index: 4, kind: input, shape index: {}]
  %s5 = inlined_call_operand.hbm [shape: f32[128,128], index: 5, kind: input, shape index: {}]
  %s6 = inlined_call_operand.vmem [shape: f32[1,128], index: 6, kind: input, shape index: {}]
  %s7 = inlined_call_operand.hbm [shape: f32[256,128], index: 7, kind: output, shape index: {0}]
  %s8 = inlined_call_operand.hbm [shape: f32[256,128], index: 8, kind: output, shape index: {1}]
  %9 = xla_tuple %s7, %s8
  %s10 = sld [smem:[#allocation0]]
  $region130: #{tpu_custom_call.1} parent=0
    _
  %s12 = ssub.s32 1, %s10
  %s13 = scalar_select 0, %s12, %s10
  $region1: #{tpu_custom_call.1} parent=0
    #allocation3 [shape = 'u8[65536]{0}', space=vmem, size = 0x10000, scoped, tag = 'input window, operand 0']
    #allocation4 [shape = 'u8[65536]{0}', space=vmem, size = 0x10000, scoped, tag = 'input window, operand 1']
    #allocation5 [shape = 's32[2]{0}', space=sflag, size = 0x8, scoped, tag = 'scoped memory for tpu_custom_call.1']
    #allocation6 [shape = 's32[2]{0}', space=sflag, size = 0x8, scoped, tag = 'scoped memory for tpu_custom_call.1']
    #allocation7 [shape = 'u8[65536]{0}', space=vmem, size = 0x10000, scoped, tag = 'input window, operand 3, single buffered']
    #allocation8 [shape = 's32[1]{0}', space=sflag, size = 0x4, scoped, tag = 'scoped memory for tpu_custom_call.1']
    #allocation9 [shape = 'u8[65536]{0}', space=vmem, size = 0x10000, scoped, tag = 'input window, operand 5, single buffered']
    #allocation10 [shape = 'u8[131072]{0}', space=vmem, size = 0x20000, scoped, tag = 'output window, operand 0']
    #allocation11 [shape = 'u8[131072]{0}', space=vmem, size = 0x20000, scoped, tag = 'output window, operand 1']
    #allocation12 [shape = 's32[2]{0}', space=sflag, size = 0x8, scoped, tag = 'scoped memory for tpu_custom_call.1']
    %14 = vsyncpa [#allocation5], 0
    %s15 = scalar_lea.sflag [#allocation5], 1
    %16 = vsyncpa %s15, 0
    %17 = vsyncpa [#allocation8], 0
    %18 = vsyncpa [#allocation6], 0
    %s19 = scalar_lea.sflag [#allocation6], 1
    %20 = vsyncpa %s19, 0
    %21 = vsyncpa [#allocation12], 0
    %s22 = scalar_lea.sflag [#allocation12], 1
    %23 = vsyncpa %s22, 0
    loop: start=0, step=1, limit=6
    $region2: #{tpu_custom_call.1} parent=1 // loop_pre_header
      _
    $region3: #{tpu_custom_call.1} parent=1 // loop_header
      %s25 = sphi 0, %s29
      %p26 = scmp.ge.s32.totalorder %s25, 6
      %s32 = sphi 0, %s44
      %s33 = sphi 0, %s40
      %s34 = sphi 0, %s32
      %s35 = sphi 0, %s33
      %s36 = sphi 0, %s34
      %s37 = sphi 0, %s35
      %s49 = sphi 0, %s51
      %s52 = sphi 0, %s49
      %s53 = sphi 0, %s52
      %s69 = sphi 0, %s53
      %s75 = sphi 0, %s77
      %s78 = sphi 0, %s75
      %s79 = sphi 0, %s78
      %s95 = sphi 0, %s79
      %s101 = sphi 0, %s103
      %s104 = sphi 0, %s101
      %s105 = sphi 0, %s104
      %s121 = sphi 0, %s105
      %s125 = sphi 0, %s125
      %s127 = sphi 0, %s125
      %s128 = sphi 0, %s127
      %s142 = sphi 0, %s128
      %s146 = sphi 0, %s146
      %s148 = sphi 0, %s146
      %s149 = sphi 0, %s148
      %s163 = sphi 0, %s149
      %s167 = sphi 0, %s167
      %s169 = sphi 0, %s167
      %s170 = sphi 0, %s169
      %s184 = sphi 0, %s170
      %s188 = sphi 0, %s188
      %s190 = sphi 0, %s188
      %s191 = sphi 0, %s190
      %s205 = sphi 0, %s191
      %s211 = sphi 0, %s213
      %s214 = sphi 0, %s211
      %s215 = sphi 0, %s214
      %s231 = sphi 0, %s215
      %s237 = sphi 0, %s239
      %s240 = sphi 0, %s237
      %s241 = sphi 0, %s240
      %s257 = sphi 0, %s241
    $region4: #{tpu_custom_call.1} parent=1 // loop_header_branch
      %28 = sbr.rel (%p26) target = $region8
    $region5: #{tpu_custom_call.1} parent=1 // loop_body
      %s30 = ssub.s32 %s25, 1
      %s31 = ssub.s32 %s25, 2
      %s38 = sadd.s32 1, %s33
      %p39 = scmp.ge.s32.totalorder %s38, 2
      %s40 = scalar_select %p39, 0, %s38
      %s41 = sadd.s32 1, %s32
      %s42 = scalar_select %p39, %s41, %s32
      %p43 = scmp.ge.s32.totalorder %s42, 2
      %s44 = scalar_select %p43, 0, %s42
      %s45 = ssub.s32 %s32, %s44
      %s46 = ssub.s32 %s33, %s40
      %s47 = sor.u32 %s45, %s46
      %p48 = scmp.eq.s32.totalorder %s47, 0
      %s50 = sadd.s32 %s49, 1
      %s51 = scalar_select %p48, %s49, %s50
      %p54 = pneg %p48
      %p55 = scmp.eq.s32.totalorder %s25, 3
      %p56 = por %p54, %p55
      %p57 = scmp.ne.s32.totalorder %s49, %s52
      %p58 = scmp.eq.s32.totalorder %s25, 0
      %p59 = por %p57, %p58
      %p60 = scmp.ne.s32.totalorder %s49, %s52
      %p61 = scmp.eq.s32.totalorder %s30, 3
      %p62 = por %p60, %p61
      %p63 = scmp.ne.s32.totalorder %s52, %s53
      %p64 = scmp.eq.s32.totalorder %s30, 0
      %p65 = por %p63, %p64
      %p66 = scmp.ne.s32.totalorder %s52, %s53
      %p67 = scmp.eq.s32.totalorder %s31, 3
      %p68 = por %p66, %p67
      %p70 = scmp.ne.s32.totalorder %s53, %s69
      %p71 = scmp.eq.s32.totalorder %s31, 0
      %p72 = por %p70, %p71
      %s73 = ssub.s32 %s33, %s40
      %p74 = scmp.eq.s32.totalorder %s73, 0
      %s76 = sadd.s32 %s75, 1
      %s77 = scalar_select %p74, %s75, %s76
      %p80 = pneg %p74
      %p81 = scmp.eq.s32.totalorder %s25, 3
      %p82 = por %p80, %p81
      %p83 = scmp.ne.s32.totalorder %s75, %s78
      %p84 = scmp.eq.s32.totalorder %s25, 0
      %p85 = por %p83, %p84
      %p86 = scmp.ne.s32.totalorder %s75, %s78
      %p87 = scmp.eq.s32.totalorder %s30, 3
      %p88 = por %p86, %p87
      %p89 = scmp.ne.s32.totalorder %s78, %s79
      %p90 = scmp.eq.s32.totalorder %s30, 0
      %p91 = por %p89, %p90
      %p92 = scmp.ne.s32.totalorder %s78, %s79
      %p93 = scmp.eq.s32.totalorder %s31, 3
      %p94 = por %p92, %p93
      %p96 = scmp.ne.s32.totalorder %s79, %s95
      %p97 = scmp.eq.s32.totalorder %s31, 0
      %p98 = por %p96, %p97
      %s99 = ssub.s32 %s32, %s44
      %p100 = scmp.eq.s32.totalorder %s99, 0
      %s102 = sadd.s32 %s101, 1
      %s103 = scalar_select %p100, %s101, %s102
      %p106 = pneg %p100
      %p107 = scmp.eq.s32.totalorder %s25, 3
      %p108 = por %p106, %p107
      %p109 = scmp.ne.s32.totalorder %s101, %s104
      %p110 = scmp.eq.s32.totalorder %s25, 0
      %p111 = por %p109, %p110
      %p112 = scmp.ne.s32.totalorder %s101, %s104
      %p113 = scmp.eq.s32.totalorder %s30, 3
      %p114 = por %p112, %p113
      %p115 = scmp.ne.s32.totalorder %s104, %s105
      %p116 = scmp.eq.s32.totalorder %s30, 0
      %p117 = por %p115, %p116
      %p118 = scmp.ne.s32.totalorder %s104, %s105
      %p119 = scmp.eq.s32.totalorder %s31, 3
      %p120 = por %p118, %p119
      %p122 = scmp.ne.s32.totalorder %s105, %s121
      %p123 = scmp.eq.s32.totalorder %s31, 0
      %p124 = por %p122, %p123
      %s126 = sadd.s32 %s125, 1
      %p129 = scmp.eq.s32.totalorder %s25, 3
      %p130 = scmp.ne.s32.totalorder %s125, %s127
      %p131 = scmp.eq.s32.totalorder %s25, 0
      %p132 = por %p130, %p131
      %p133 = scmp.ne.s32.totalorder %s125, %s127
      %p134 = scmp.eq.s32.totalorder %s30, 3
      %p135 = por %p133, %p134
      %p136 = scmp.ne.s32.totalorder %s127, %s128
      %p137 = scmp.eq.s32.totalorder %s30, 0
      %p138 = por %p136, %p137
      %p139 = scmp.ne.s32.totalorder %s127, %s128
      %p140 = scmp.eq.s32.totalorder %s31, 3
      %p141 = por %p139, %p140
      %p143 = scmp.ne.s32.totalorder %s128, %s142
      %p144 = scmp.eq.s32.totalorder %s31, 0
      %p145 = por %p143, %p144
      %s147 = sadd.s32 %s146, 1
      %p150 = scmp.eq.s32.totalorder %s25, 3
      %p151 = scmp.ne.s32.totalorder %s146, %s148
      %p152 = scmp.eq.s32.totalorder %s25, 0
      %p153 = por %p151, %p152
      %p154 = scmp.ne.s32.totalorder %s146, %s148
      %p155 = scmp.eq.s32.totalorder %s30, 3
      %p156 = por %p154, %p155
      %p157 = scmp.ne.s32.totalorder %s148, %s149
      %p158 = scmp.eq.s32.totalorder %s30, 0
      %p159 = por %p157, %p158
      %p160 = scmp.ne.s32.totalorder %s148, %s149
      %p161 = scmp.eq.s32.totalorder %s31, 3
      %p162 = por %p160, %p161
      %p164 = scmp.ne.s32.totalorder %s149, %s163
      %p165 = scmp.eq.s32.totalorder %s31, 0
      %p166 = por %p164, %p165
      %s168 = sadd.s32 %s167, 1
      %p171 = scmp.eq.s32.totalorder %s25, 3
      %p172 = scmp.ne.s32.totalorder %s167, %s169
      %p173 = scmp.eq.s32.totalorder %s25, 0
      %p174 = por %p172, %p173
      %p175 = scmp.ne.s32.totalorder %s167, %s169
      %p176 = scmp.eq.s32.totalorder %s30, 3
      %p177 = por %p175, %p176
      %p178 = scmp.ne.s32.totalorder %s169, %s170
      %p179 = scmp.eq.s32.totalorder %s30, 0
      %p180 = por %p178, %p179
      %p181 = scmp.ne.s32.totalorder %s169, %s170
      %p182 = scmp.eq.s32.totalorder %s31, 3
      %p183 = por %p181, %p182
      %p185 = scmp.ne.s32.totalorder %s170, %s184
      %p186 = scmp.eq.s32.totalorder %s31, 0
      %p187 = por %p185, %p186
      %s189 = sadd.s32 %s188, 1
      %p192 = scmp.eq.s32.totalorder %s25, 3
      %p193 = scmp.ne.s32.totalorder %s188, %s190
      %p194 = scmp.eq.s32.totalorder %s25, 0
      %p195 = por %p193, %p194
      %p196 = scmp.ne.s32.totalorder %s188, %s190
      %p197 = scmp.eq.s32.totalorder %s30, 3
      %p198 = por %p196, %p197
      %p199 = scmp.ne.s32.totalorder %s190, %s191
      %p200 = scmp.eq.s32.totalorder %s30, 0
      %p201 = por %p199, %p200
      %p202 = scmp.ne.s32.totalorder %s190, %s191
      %p203 = scmp.eq.s32.totalorder %s31, 3
      %p204 = por %p202, %p203
      %p206 = scmp.ne.s32.totalorder %s191, %s205
      %p207 = scmp.eq.s32.totalorder %s31, 0
      %p208 = por %p206, %p207
      %s209 = ssub.s32 %s32, %s44
      %p210 = scmp.eq.s32.totalorder %s209, 0
      %s212 = sadd.s32 %s211, 1
      %s213 = scalar_select %p210, %s211, %s212
      %p216 = pneg %p210
      %p217 = scmp.eq.s32.totalorder %s25, 3
      %p218 = por %p216, %p217
      %p219 = scmp.ne.s32.totalorder %s211, %s214
      %p220 = scmp.eq.s32.totalorder %s25, 0
      %p221 = por %p219, %p220
      %p222 = scmp.ne.s32.totalorder %s211, %s214
      %p223 = scmp.eq.s32.totalorder %s30, 3
      %p224 = por %p222, %p223
      %p225 = scmp.ne.s32.totalorder %s214, %s215
      %p226 = scmp.eq.s32.totalorder %s30, 0
      %p227 = por %p225, %p226
      %p228 = scmp.ne.s32.totalorder %s214, %s215
      %p229 = scmp.eq.s32.totalorder %s31, 3
      %p230 = por %p228, %p229
      %p232 = scmp.ne.s32.totalorder %s215, %s231
      %p233 = scmp.eq.s32.totalorder %s31, 0
      %p234 = por %p232, %p233
      %s235 = ssub.s32 %s32, %s44
      %p236 = scmp.eq.s32.totalorder %s235, 0
      %s238 = sadd.s32 %s237, 1
      %s239 = scalar_select %p236, %s237, %s238
      %p242 = pneg %p236
      %p243 = scmp.eq.s32.totalorder %s25, 3
      %p244 = por %p242, %p243
      %p245 = scmp.ne.s32.totalorder %s237, %s240
      %p246 = scmp.eq.s32.totalorder %s25, 0
      %p247 = por %p245, %p246
      %p248 = scmp.ne.s32.totalorder %s237, %s240
      %p249 = scmp.eq.s32.totalorder %s30, 3
      %p250 = por %p248, %p249
      %p251 = scmp.ne.s32.totalorder %s240, %s241
      %p252 = scmp.eq.s32.totalorder %s30, 0
      %p253 = por %p251, %p252
      %p254 = scmp.ne.s32.totalorder %s240, %s241
      %p255 = scmp.eq.s32.totalorder %s31, 3
      %p256 = por %p254, %p255
      %p258 = scmp.ne.s32.totalorder %s241, %s257
      %p259 = scmp.eq.s32.totalorder %s31, 0
      %p260 = por %p258, %p259
      %p261 = scmp.le.s32.totalorder 1, %s25
      %p262 = scmp.lt.s32.totalorder %s25, 5
      %p263 = pnand %p261, %p262
      %p264 = pneg %p263
      // Predicated region
      $region9: #{tpu_custom_call.1} parent=5 // pred_check
        _
      $region10: #{tpu_custom_call.1} parent=5 // pred_check_branch
        %266 = sbr.rel (%p263) target = $region12
      $region11: #{tpu_custom_call.1} parent=5 // pred_region
        %s267 = ssub.s32 %s25, 1
        // Predicated region
        $region13: #{tpu_custom_call.1} parent=11 // pred_check
          %p268 = pneg %p138
        $region14: #{tpu_custom_call.1} parent=11 // pred_check_branch
          %270 = sbr.rel (%p268) target = $region16
        $region15: #{tpu_custom_call.1} parent=11 // pred_region
          %s272 = ssub.s32 2048, 2048
          %273 = vsyncadd [#allocation8], %s272
          %s274 = sshll.u32 [#allocation7], 4
          %s275 = int_to_ptr.vmem [resolvable:$true] %s274
          %280 = dma.hbm_to_vmem [thread:$0]  %s3, 2048, %s275, [#allocation8], 128, 128, 8
        $region16: #{tpu_custom_call.1} parent=11 // pred_fallthru
          _
        // Predicated region
        $region17: #{tpu_custom_call.1} parent=11 // pred_check
          %p281 = pneg %p159
        $region18: #{tpu_custom_call.1} parent=11 // pred_check_branch
          %283 = sbr.rel (%p281) target = $region20
        $region19: #{tpu_custom_call.1} parent=11 // pred_region
          _
        $region20: #{tpu_custom_call.1} parent=11 // pred_fallthru
          _
        // Predicated region
        $region21: #{tpu_custom_call.1} parent=11 // pred_check
          %p284 = pneg %p180
        $region22: #{tpu_custom_call.1} parent=11 // pred_check_branch
          %286 = sbr.rel (%p284) target = $region24
        $region23: #{tpu_custom_call.1} parent=11 // pred_region
          %s288 = ssub.s32 2048, 2048
          %289 = vsyncadd [#allocation8], %s288
          %s290 = sshll.u32 [#allocation9], 4
          %s291 = int_to_ptr.vmem [resolvable:$true] %s290
          %296 = dma.hbm_to_vmem [thread:$0]  %s5, 2048, %s291, [#allocation8], 128, 128, 8
        $region24: #{tpu_custom_call.1} parent=11 // pred_fallthru
          _
        // Predicated region
        $region25: #{tpu_custom_call.1} parent=11 // pred_check
          %p297 = pneg %p201
        $region26: #{tpu_custom_call.1} parent=11 // pred_check_branch
          %299 = sbr.rel (%p297) target = $region28
        $region27: #{tpu_custom_call.1} parent=11 // pred_region
          _
        $region28: #{tpu_custom_call.1} parent=11 // pred_fallthru
          _
      $region12: #{tpu_custom_call.1} parent=5 // pred_fallthru
        _
      %p300 = scmp.lt.s32.totalorder %s25, 4
      // Predicated region
      $region29: #{tpu_custom_call.1} parent=5 // pred_check
        %p301 = pneg %p300
      $region30: #{tpu_custom_call.1} parent=5 // pred_check_branch
        %303 = sbr.rel (%p301) target = $region32
      $region31: #{tpu_custom_call.1} parent=5 // pred_region
        // Predicated region
        $region33: #{tpu_custom_call.1} parent=31 // pred_check
          %p304 = pneg %p59
        $region34: #{tpu_custom_call.1} parent=31 // pred_check_branch
          %306 = sbr.rel (%p304) target = $region36
        $region35: #{tpu_custom_call.1} parent=31 // pred_region
          %s307 = sand.u32 %s49, 1
          %s308 = sand.u32 %s49, 1
          %s309 = smul.addr %s308, 64
          %s310 = scalar_lea.vmem [#allocation3], %s309
          %s311 = smul.u32 16, %s32
          %s312 = smul.addr %s311, 2
          %s313 = sadd.s32 %s33, %s312
          %s314 = smul.addr %s313, 4
          %s315 = scalar_lea.vmem %s0, %s314
          // Predicated region
          $region37: #{tpu_custom_call.1} parent=35 // pred_check
            _
          $region38: #{tpu_custom_call.1} parent=35 // pred_check_branch
            %317 = sbr.rel (0) target = $region40
          $region39: #{tpu_custom_call.1} parent=35 // pred_region
            // Predicated region
            $region41: #{tpu_custom_call.1} parent=39 // pred_check
              _
            $region42: #{tpu_custom_call.1} parent=39 // pred_check_branch
              %319 = sbr.rel target = $region44
            $region43: #{tpu_custom_call.1} parent=39 // pred_region
              // Predicated region
              $region56: #{tpu_custom_call.1} parent=43 // pred_check
                _
              $region57: #{tpu_custom_call.1} parent=43 // pred_check_branch
                %364 = sbr.rel (0) target = $region59
              $region58: #{tpu_custom_call.1} parent=43 // pred_region
                loop: start=0, step=1, limit=1
                $region60: #{tpu_custom_call.1} parent=58 // loop_pre_header
                  _
                $region61: #{tpu_custom_call.1} parent=58 // loop_header
                  %s366 = sphi 0, %s370
                  %p367 = scmp.ge.s32.totalorder %s366, 1
                  %s371 = sphi %s315, %s315
                  %s372 = sphi %s310, %s310
                $region62: #{tpu_custom_call.1} parent=58 // loop_header_branch
                  %369 = sbr.rel (%p367) target = $region66
                $region63: #{tpu_custom_call.1} parent=58 // loop_body
                  _
                $region64: #{tpu_custom_call.1} parent=58 // loop_footer
                  %s370 = sadd.s32 1, %s366
                $region65: #{tpu_custom_call.1} parent=58 // loop_footer_branch
                  %365 = sbr.rel target = $region61
                $region66: #{tpu_custom_call.1} parent=58 // loop_exit
                  _
                loop: start=0, step=1, limit=1
                $region67: #{tpu_custom_call.1} parent=58 // loop_pre_header
                  _
                $region68: #{tpu_custom_call.1} parent=58 // loop_header
                  %s375 = sphi 0, %s379
                  %p376 = scmp.ge.s32.totalorder %s375, 1
                  %s380 = sphi %s315, %s315
                  %s381 = sphi %s310, %s310
                $region69: #{tpu_custom_call.1} parent=58 // loop_header_branch
                  %378 = sbr.rel (%p376) target = $region73
                $region70: #{tpu_custom_call.1} parent=58 // loop_body
                  %v382 = vld [vmem:[%s380] sm:$0xf]
                  %383 = vst [vmem:[%s381] sm:$0xf] %v382
                  %v384 = vld [vmem:[%s380 + $0x8] sm:$0xf]
                  %385 = vst [vmem:[%s381 + $0x4] sm:$0xf] %v384
                  %v386 = vld [vmem:[%s380 + $0x10] sm:$0xf]
                  %387 = vst [vmem:[%s381 + $0x8] sm:$0xf] %v386
                  %v388 = vld [vmem:[%s380 + $0x18] sm:$0xf]
                  %389 = vst [vmem:[%s381 + $0xc] sm:$0xf] %v388
                  %v390 = vld [vmem:[%s380 + $0x20] sm:$0xf]
                  %391 = vst [vmem:[%s381 + $0x10] sm:$0xf] %v390
                  %v392 = vld [vmem:[%s380 + $0x28] sm:$0xf]
                  %393 = vst [vmem:[%s381 + $0x14] sm:$0xf] %v392
                  %v394 = vld [vmem:[%s380 + $0x30] sm:$0xf]
                  %395 = vst [vmem:[%s381 + $0x18] sm:$0xf] %v394
                  %v396 = vld [vmem:[%s380 + $0x38] sm:$0xf]
                  %397 = vst [vmem:[%s381 + $0x1c] sm:$0xf] %v396
                  %v398 = vld [vmem:[%s380 + $0x40] sm:$0xf]
                  %399 = vst [vmem:[%s381 + $0x20] sm:$0xf] %v398
                  %v400 = vld [vmem:[%s380 + $0x48] sm:$0xf]
                  %401 = vst [vmem:[%s381 + $0x24] sm:$0xf] %v400
                  %v402 = vld [vmem:[%s380 + $0x50] sm:$0xf]
                  %403 = vst [vmem:[%s381 + $0x28] sm:$0xf] %v402
                  %v404 = vld [vmem:[%s380 + $0x58] sm:$0xf]
                  %405 = vst [vmem:[%s381 + $0x2c] sm:$0xf] %v404
                  %v406 = vld [vmem:[%s380 + $0x60] sm:$0xf]
                  %407 = vst [vmem:[%s381 + $0x30] sm:$0xf] %v406
                  %v408 = vld [vmem:[%s380 + $0x68] sm:$0xf]
                  %409 = vst [vmem:[%s381 + $0x34] sm:$0xf] %v408
                  %v410 = vld [vmem:[%s380 + $0x70] sm:$0xf]
                  %411 = vst [vmem:[%s381 + $0x38] sm:$0xf] %v410
                  %v412 = vld [vmem:[%s380 + $0x78] sm:$0xf]
                  %413 = vst [vmem:[%s381 + $0x3c] sm:$0xf] %v412
                $region71: #{tpu_custom_call.1} parent=58 // loop_footer
                  %s379 = sadd.s32 1, %s375
                $region72: #{tpu_custom_call.1} parent=58 // loop_footer_branch
                  %374 = sbr.rel target = $region68
                $region73: #{tpu_custom_call.1} parent=58 // loop_exit
                  _
              $region59: #{tpu_custom_call.1} parent=43 // pred_fallthru
                _
            $region44: #{tpu_custom_call.1} parent=39 // pred_fallthru
              _
            // Predicated region
            $region45: #{tpu_custom_call.1} parent=39 // pred_check
              _
            $region46: #{tpu_custom_call.1} parent=39 // pred_check_branch
              %321 = sbr.rel (0) target = $region48
            $region47: #{tpu_custom_call.1} parent=39 // pred_region
              loop: start=0, step=1, limit=1
              $region49: #{tpu_custom_call.1} parent=47 // loop_pre_header
                _
              $region50: #{tpu_custom_call.1} parent=47 // loop_header
                %s324 = sphi 0, %s328
                %p325 = scmp.ge.s32.totalorder %s324, 1
                %s329 = sphi %s315, %s315
                %s330 = sphi %s310, %s310
              $region51: #{tpu_custom_call.1} parent=47 // loop_header_branch
                %327 = sbr.rel (%p325) target = $region55
              $region52: #{tpu_custom_call.1} parent=47 // loop_body
                %v331 = vld [vmem:[%s329] sm:$0xf]
                %332 = vst [vmem:[%s330] sm:$0xf] %v331
                %v333 = vld [vmem:[%s329 + $0x8] sm:$0xf]
                %334 = vst [vmem:[%s330 + $0x4] sm:$0xf] %v333
                %v335 = vld [vmem:[%s329 + $0x10] sm:$0xf]
                %336 = vst [vmem:[%s330 + $0x8] sm:$0xf] %v335
                %v337 = vld [vmem:[%s329 + $0x18] sm:$0xf]
                %338 = vst [vmem:[%s330 + $0xc] sm:$0xf] %v337
                %v339 = vld [vmem:[%s329 + $0x20] sm:$0xf]
                %340 = vst [vmem:[%s330 + $0x10] sm:$0xf] %v339
                %v341 = vld [vmem:[%s329 + $0x28] sm:$0xf]
                %342 = vst [vmem:[%s330 + $0x14] sm:$0xf] %v341
                %v343 = vld [vmem:[%s329 + $0x30] sm:$0xf]
                %344 = vst [vmem:[%s330 + $0x18] sm:$0xf] %v343
                %v345 = vld [vmem:[%s329 + $0x38] sm:$0xf]
                %346 = vst [vmem:[%s330 + $0x1c] sm:$0xf] %v345
                %v347 = vld [vmem:[%s329 + $0x40] sm:$0xf]
                %348 = vst [vmem:[%s330 + $0x20] sm:$0xf] %v347
                %v349 = vld [vmem:[%s329 + $0x48] sm:$0xf]
                %350 = vst [vmem:[%s330 + $0x24] sm:$0xf] %v349
                %v351 = vld [vmem:[%s329 + $0x50] sm:$0xf]
                %352 = vst [vmem:[%s330 + $0x28] sm:$0xf] %v351
                %v353 = vld [vmem:[%s329 + $0x58] sm:$0xf]
                %354 = vst [vmem:[%s330 + $0x2c] sm:$0xf] %v353
                %v355 = vld [vmem:[%s329 + $0x60] sm:$0xf]
                %356 = vst [vmem:[%s330 + $0x30] sm:$0xf] %v355
                %v357 = vld [vmem:[%s329 + $0x68] sm:$0xf]
                %358 = vst [vmem:[%s330 + $0x34] sm:$0xf] %v357
                %v359 = vld [vmem:[%s329 + $0x70] sm:$0xf]
                %360 = vst [vmem:[%s330 + $0x38] sm:$0xf] %v359
                %v361 = vld [vmem:[%s329 + $0x78] sm:$0xf]
                %362 = vst [vmem:[%s330 + $0x3c] sm:$0xf] %v361
              $region53: #{tpu_custom_call.1} parent=47 // loop_footer
                %s328 = sadd.s32 1, %s324
              $region54: #{tpu_custom_call.1} parent=47 // loop_footer_branch
                %323 = sbr.rel target = $region50
              $region55: #{tpu_custom_call.1} parent=47 // loop_exit
                _
            $region48: #{tpu_custom_call.1} parent=39 // pred_fallthru
              _
          $region40: #{tpu_custom_call.1} parent=35 // pred_fallthru
            _
          %414 = vnop
        $region36: #{tpu_custom_call.1} parent=31 // pred_fallthru
          _
        // Predicated region
        $region74: #{tpu_custom_call.1} parent=31 // pred_check
          %p415 = pneg %p85
        $region75: #{tpu_custom_call.1} parent=31 // pred_check_branch
          %417 = sbr.rel (%p415) target = $region77
        $region76: #{tpu_custom_call.1} parent=31 // pred_region
          %s418 = sand.u32 %s75, 1
          %s419 = scalar_lea.sflag [#allocation5], %s418
          %s420 = sand.u32 %s75, 1
          %s421 = smul.addr %s420, 64
          %s422 = scalar_lea.vmem [#allocation4], %s421
          %s423 = smul.u32 16, %s33
          %s425 = ssub.s32 1024, 1024
          %426 = vsyncadd %s419, %s425
          %s427 = smul.addr %s423, 64
          %s428 = scalar_lea.hbm %s1, %s427
          %s429 = sshll.u32 %s422, 4
          %s430 = int_to_ptr.vmem [resolvable:$true] %s429
          %435 = dma.hbm_to_vmem [thread:$0]  %s428, 1024, %s430, %s419, 64, 64, 4
        $region77: #{tpu_custom_call.1} parent=31 // pred_fallthru
          _
        // Predicated region
        $region78: #{tpu_custom_call.1} parent=31 // pred_check
          %p436 = pneg %p111
        $region79: #{tpu_custom_call.1} parent=31 // pred_check_branch
          %438 = sbr.rel (%p436) target = $region81
        $region80: #{tpu_custom_call.1} parent=31 // pred_region
          %s439 = smul.u32 16, %s32
          %p440 = scmp.lt.s32.totalorder %s439, 31
          %s441 = scalar_select %p440, %s439, 31
          %s442 = smul.addr %s441, 8
          %s443 = scalar_lea.vmem %s2, %s442
          %s444 = smul.u32 16, %s32
        $region81: #{tpu_custom_call.1} parent=31 // pred_fallthru
          _
      $region32: #{tpu_custom_call.1} parent=5 // pred_fallthru
        _
      %p445 = scmp.le.s32.totalorder 1, %s25
      %p446 = scmp.lt.s32.totalorder %s25, 5
      %p447 = pnand %p445, %p446
      %p448 = pneg %p447
      // Predicated region
      $region82: #{tpu_custom_call.1} parent=5 // pred_check
        _
      $region83: #{tpu_custom_call.1} parent=5 // pred_check_branch
        %450 = sbr.rel (%p447) target = $region85
      $region84: #{tpu_custom_call.1} parent=5 // pred_region
        %s451 = ssub.s32 %s25, 1
        %s452 = sand.u32 %s52, 1
        %s453 = sand.u32 %s52, 1
        %s454 = smul.addr %s453, 64
        %s455 = scalar_lea.vmem [#allocation3], %s454
        // Predicated region
        $region86: #{tpu_custom_call.1} parent=84 // pred_check
          %p456 = pneg %p65
        $region87: #{tpu_custom_call.1} parent=84 // pred_check_branch
          %458 = sbr.rel (%p456) target = $region89
        $region88: #{tpu_custom_call.1} parent=84 // pred_region
          _
        $region89: #{tpu_custom_call.1} parent=84 // pred_fallthru
          _
        %s459 = sand.u32 %s78, 1
        %s460 = scalar_lea.sflag [#allocation5], %s459
        %s461 = sand.u32 %s78, 1
        %s462 = smul.addr %s461, 64
        %s463 = scalar_lea.vmem [#allocation4], %s462
        // Predicated region
        $region90: #{tpu_custom_call.1} parent=84 // pred_check
          %p464 = pneg %p91
        $region91: #{tpu_custom_call.1} parent=84 // pred_check_branch
          %466 = sbr.rel (%p464) target = $region93
        $region92: #{tpu_custom_call.1} parent=84 // pred_region
          %467 = dma.done %s460, 1024
        $region93: #{tpu_custom_call.1} parent=84 // pred_fallthru
          _
        // Predicated region
        $region94: #{tpu_custom_call.1} parent=84 // pred_check
          %p468 = pneg %p138
        $region95: #{tpu_custom_call.1} parent=84 // pred_check_branch
          %470 = sbr.rel (%p468) target = $region97
        $region96: #{tpu_custom_call.1} parent=84 // pred_region
          %471 = dma.done [#allocation8], 2048
        $region97: #{tpu_custom_call.1} parent=84 // pred_fallthru
          _
        // Predicated region
        $region98: #{tpu_custom_call.1} parent=84 // pred_check
          %p472 = pneg %p180
        $region99: #{tpu_custom_call.1} parent=84 // pred_check_branch
          %474 = sbr.rel (%p472) target = $region101
        $region100: #{tpu_custom_call.1} parent=84 // pred_region
          %475 = dma.done [#allocation8], 2048
        $region101: #{tpu_custom_call.1} parent=84 // pred_fallthru
          _
        %s476 = sand.u32 %s52, 1
        %s477 = sand.u32 %s52, 1
        %s478 = smul.addr %s477, 64
        %s479 = scalar_lea.vmem [#allocation3], %s478
        %p480 = pneg %p65
        %p481 = pneg %p62
        %s482 = sand.u32 %s78, 1
        %s483 = scalar_lea.sflag [#allocation5], %s482
        %s484 = sand.u32 %s78, 1
        %s485 = smul.addr %s484, 64
        %s486 = scalar_lea.vmem [#allocation4], %s485
        %p487 = pneg %p91
        %p488 = pneg %p88
        %s489 = smul.u32 16, %s34
        %p490 = scmp.lt.s32.totalorder %s489, 31
        %s491 = scalar_select %p490, %s489, 31
        %s492 = smul.addr %s491, 8
        %s493 = scalar_lea.vmem %s2, %s492
        %p494 = pneg %p117
        %p495 = pneg %p114
        %p496 = pneg %p138
        %p497 = pneg %p135
        %p498 = pneg %p159
        %p499 = pneg %p156
        %p500 = pneg %p180
        %p501 = pneg %p177
        %p502 = pneg %p201
        %p503 = pneg %p198
        %p504 = pneg %p227
        %p505 = pneg %p224
        %s506 = sand.u32 %s214, 1
        %s507 = scalar_lea.sflag [#allocation6], %s506
        %s508 = sand.u32 %s214, 1
        %s509 = smul.addr %s508, 128
        %s510 = scalar_lea.vmem [#allocation10], %s509
        %p511 = pneg %p253
        %p512 = pneg %p250
        %s513 = sand.u32 %s240, 1
        %s514 = scalar_lea.sflag [#allocation12], %s513
        %s515 = sand.u32 %s240, 1
        %s516 = smul.addr %s515, 128
        %s517 = scalar_lea.vmem [#allocation11], %s516
        %s518 = smul.u32 16, %s34
        %s519 = smul.u32 16, %s35
        %s520 = smul.u32 16, %s34
        %p521 = scmp.lt.s32.totalorder %s520, 31
        %s522 = scalar_select %p521, %s520, 31
        %s523 = smul.addr %s522, 8
        %s524 = scalar_lea.vmem %s2, %s523
        %s525 = smul.u32 16, %s34
        %s526 = smul.u32 16, %s34
        %s527 = smul.u32 16, %s34
        %p529 = scmp.eq.s32.totalorder %s35, 0
        // Predicated region
        $region102: #{tpu_custom_call.1} parent=84 // pred_check
          %p530 = pneg %p529
        $region103: #{tpu_custom_call.1} parent=84 // pred_check_branch
          %532 = sbr.rel (%p530) target = $region105
        $region104: #{tpu_custom_call.1} parent=84 // pred_region
          %533 = vst [vmem:[#allocation2] sm:$0xff] 0.0
          %534 = vst [vmem:[#allocation2 + $0x8] sm:$0xff] 0.0
          %535 = vst [vmem:[#allocation2 + $0x10] sm:$0xff] 0.0
          %536 = vst [vmem:[#allocation2 + $0x18] sm:$0xff] 0.0
          %537 = vst [vmem:[#allocation2 + $0x20] sm:$0xff] 0.0
          %538 = vst [vmem:[#allocation2 + $0x28] sm:$0xff] 0.0
          %539 = vst [vmem:[#allocation2 + $0x30] sm:$0xff] 0.0
          %540 = vst [vmem:[#allocation2 + $0x38] sm:$0xff] 0.0
          %541 = vst [vmem:[#allocation2 + $0x40] sm:$0xff] 0.0
          %542 = vst [vmem:[#allocation2 + $0x48] sm:$0xff] 0.0
          %543 = vst [vmem:[#allocation2 + $0x50] sm:$0xff] 0.0
          %544 = vst [vmem:[#allocation2 + $0x58] sm:$0xff] 0.0
          %545 = vst [vmem:[#allocation2 + $0x60] sm:$0xff] 0.0
          %546 = vst [vmem:[#allocation2 + $0x68] sm:$0xff] 0.0
          %547 = vst [vmem:[#allocation2 + $0x70] sm:$0xff] 0.0
          %548 = vst [vmem:[#allocation2 + $0x78] sm:$0xff] 0.0
        $region105: #{tpu_custom_call.1} parent=84 // pred_fallthru
          _
        %v549 = vld [vmem:[#allocation2] sm:$0xff]
        %v550 = vld [vmem:[#allocation2 + $0x8] sm:$0xff]
        %v551 = vld [vmem:[#allocation2 + $0x10] sm:$0xff]
        %v552 = vld [vmem:[#allocation2 + $0x18] sm:$0xff]
        %v553 = vld [vmem:[#allocation2 + $0x20] sm:$0xff]
        %v554 = vld [vmem:[#allocation2 + $0x28] sm:$0xff]
        %v555 = vld [vmem:[#allocation2 + $0x30] sm:$0xff]
        %v556 = vld [vmem:[#allocation2 + $0x38] sm:$0xff]
        %v557 = vld [vmem:[#allocation2 + $0x40] sm:$0xff]
        %v558 = vld [vmem:[#allocation2 + $0x48] sm:$0xff]
        %v559 = vld [vmem:[#allocation2 + $0x50] sm:$0xff]
        %v560 = vld [vmem:[#allocation2 + $0x58] sm:$0xff]
        %v561 = vld [vmem:[#allocation2 + $0x60] sm:$0xff]
        %v562 = vld [vmem:[#allocation2 + $0x68] sm:$0xff]
        %v563 = vld [vmem:[#allocation2 + $0x70] sm:$0xff]
        %v564 = vld [vmem:[#allocation2 + $0x78] sm:$0xff]
        %v565 = vld [vmem:[%s455] sm:$0xf]
        %v566 = vld [vmem:[%s455 + $0x4] sm:$0xf]
        %v567 = vld [vmem:[%s455 + $0x8] sm:$0xf]
        %v568 = vld [vmem:[%s455 + $0xc] sm:$0xf]
        %v569 = vld [vmem:[%s455 + $0x10] sm:$0xf]
        %v570 = vld [vmem:[%s455 + $0x14] sm:$0xf]
        %v571 = vld [vmem:[%s455 + $0x18] sm:$0xf]
        %v572 = vld [vmem:[%s455 + $0x1c] sm:$0xf]
        %v573 = vld [vmem:[%s455 + $0x20] sm:$0xf]
        %v574 = vld [vmem:[%s455 + $0x24] sm:$0xf]
        %v575 = vld [vmem:[%s455 + $0x28] sm:$0xf]
        %v576 = vld [vmem:[%s455 + $0x2c] sm:$0xf]
        %v577 = vld [vmem:[%s455 + $0x30] sm:$0xf]
        %v578 = vld [vmem:[%s455 + $0x34] sm:$0xf]
        %v579 = vld [vmem:[%s455 + $0x38] sm:$0xf]
        %v580 = vld [vmem:[%s455 + $0x3c] sm:$0xf]
        %v581 = vld [vmem:[%s463] sm:$0xf]
        %v582 = vld [vmem:[%s463 + $0x4] sm:$0xf]
        %v583 = vld [vmem:[%s463 + $0x8] sm:$0xf]
        %v584 = vld [vmem:[%s463 + $0xc] sm:$0xf]
        %v585 = vld [vmem:[%s463 + $0x10] sm:$0xf]
        %v586 = vld [vmem:[%s463 + $0x14] sm:$0xf]
        %v587 = vld [vmem:[%s463 + $0x18] sm:$0xf]
        %v588 = vld [vmem:[%s463 + $0x1c] sm:$0xf]
        %v589 = vld [vmem:[%s463 + $0x20] sm:$0xf]
        %v590 = vld [vmem:[%s463 + $0x24] sm:$0xf]
        %v591 = vld [vmem:[%s463 + $0x28] sm:$0xf]
        %v592 = vld [vmem:[%s463 + $0x2c] sm:$0xf]
        %v593 = vld [vmem:[%s463 + $0x30] sm:$0xf]
        %v594 = vld [vmem:[%s463 + $0x34] sm:$0xf]
        %v595 = vld [vmem:[%s463 + $0x38] sm:$0xf]
        %v596 = vld [vmem:[%s463 + $0x3c] sm:$0xf]
        %v613 = vunpack.c.l.b16 %v565
        %v614 = vunpack.c.l.b16 %v566
        %v615 = vunpack.c.l.b16 %v567
        %v616 = vunpack.c.l.b16 %v568
        %v617 = vunpack.c.l.b16 %v569
        %v618 = vunpack.c.l.b16 %v570
        %v619 = vunpack.c.l.b16 %v571
        %v620 = vunpack.c.l.b16 %v572
        %v621 = vunpack.c.l.b16 %v573
        %v622 = vunpack.c.l.b16 %v574
        %v623 = vunpack.c.l.b16 %v575
        %v624 = vunpack.c.l.b16 %v576
        %v625 = vunpack.c.l.b16 %v577
        %v626 = vunpack.c.l.b16 %v578
        %v627 = vunpack.c.l.b16 %v579
        %v628 = vunpack.c.l.b16 %v580
        %v629 = vpack.c.b16 %v614, %v613
        %v630 = vpack.c.b16 %v616, %v615
        %v631 = vpack.c.b16 %v618, %v617
        %v632 = vpack.c.b16 %v620, %v619
        %v633 = vpack.c.b16 %v622, %v621
        %v634 = vpack.c.b16 %v624, %v623
        %v635 = vpack.c.b16 %v626, %v625
        %v636 = vpack.c.b16 %v628, %v627
        %v661 = vunpack.c.l.b16 %v581
        %v662 = vunpack.c.l.b16 %v582
        %v663 = vunpack.c.l.b16 %v583
        %v664 = vunpack.c.l.b16 %v584
        %v665 = vunpack.c.l.b16 %v585
        %v666 = vunpack.c.l.b16 %v586
        %v667 = vunpack.c.l.b16 %v587
        %v668 = vunpack.c.l.b16 %v588
        %v669 = vunpack.c.l.b16 %v589
        %v670 = vunpack.c.l.b16 %v590
        %v671 = vunpack.c.l.b16 %v591
        %v672 = vunpack.c.l.b16 %v592
        %v673 = vunpack.c.l.b16 %v593
        %v674 = vunpack.c.l.b16 %v594
        %v675 = vunpack.c.l.b16 %v595
        %v676 = vunpack.c.l.b16 %v596
        %v677 = vpack.c.b16 %v662, %v661
        %v678 = vpack.c.b16 %v664, %v663
        %v679 = vpack.c.b16 %v666, %v665
        %v680 = vpack.c.b16 %v668, %v667
        %v681 = vpack.c.b16 %v670, %v669
        %v682 = vpack.c.b16 %v672, %v671
        %v683 = vpack.c.b16 %v674, %v673
        %v684 = vpack.c.b16 %v676, %v675
        %693 = vmatprep.subr.bf16.mxu0 0
        %694 = vmatpush1.bf16.msra.mxu0 %v677
        %695 = vmatprep.subr.bf16.mxu0 0
        %696 = vmatpush1.bf16.msra.mxu0 %v678
        %697 = vmatprep.subr.bf16.mxu0 0
        %698 = vmatpush1.bf16.msra.mxu0 %v679
        %699 = vmatprep.subr.bf16.mxu0 0
        %700 = vmatpush1.bf16.msra.mxu0 %v680
        %701 = vmatprep.subr.bf16.mxu0 0
        %702 = vmatpush1.bf16.msra.mxu0 %v681
        %703 = vmatprep.subr.bf16.mxu0 0
        %704 = vmatpush1.bf16.msra.mxu0 %v682
        %705 = vmatprep.subr.bf16.mxu0 0
        %706 = vmatpush1.bf16.msra.mxu0 %v683
        %707 = vmatprep.subr.bf16.mxu0 0
        %708 = vmatpush1.bf16.msra.mxu0 %v684
        %709 = vmatprep.subr.bf16.mxu0 0
        %710 = vmatpush1.bf16.msra.mxu0 0
        %711 = vmatprep.subr.bf16.mxu0 0
        %712 = vmatpush1.bf16.msra.mxu0 0
        %713 = vmatprep.subr.bf16.mxu0 0
        %714 = vmatpush1.bf16.msra.mxu0 0
        %715 = vmatprep.subr.bf16.mxu0 0
        %716 = vmatpush1.bf16.msra.mxu0 0
        %717 = vmatprep.subr.bf16.mxu0 0
        %718 = vmatpush1.bf16.msra.mxu0 0
        %719 = vmatprep.subr.bf16.mxu0 0
        %720 = vmatpush1.bf16.msra.mxu0 0
        %721 = vmatprep.subr.bf16.mxu0 0
        %722 = vmatpush1.bf16.msra.mxu0 0
        %723 = vmatprep.subr.bf16.mxu0 0
        %724 = vmatpush1.bf16.msra.mxu0 0
        %725 = vmatprep.mubr.bf16.mxu0 0
        %726 = vmatmul.mubr.bf16.gmra.mrb[0].mxu0 %v629
        %v727 = vpop.f32.mrb[0].mxu0
        %v728 = vadd.f32 0.0, %v727
        %v729 = vpop.f32.mrb[0].mxu0
        %v730 = vpop.f32.mrb[0].mxu0
        %v731 = vadd.f32 0.0, %v730
        %v732 = vpop.f32.mrb[0].mxu0
        %733 = vmatprep.mubr.bf16.mxu0 0
        %734 = vmatmul.mubr.bf16.gmra.mrb[0].mxu0 %v630
        %v735 = vpop.f32.mrb[0].mxu0
        %v736 = vadd.f32 0.0, %v735
        %v737 = vpop.f32.mrb[0].mxu0
        %v738 = vpop.f32.mrb[0].mxu0
        %v739 = vadd.f32 0.0, %v738
        %v740 = vpop.f32.mrb[0].mxu0
        %741 = vmatprep.mubr.bf16.mxu0 0
        %742 = vmatmul.mubr.bf16.gmra.mrb[0].mxu0 %v631
        %v743 = vpop.f32.mrb[0].mxu0
        %v744 = vadd.f32 0.0, %v743
        %v745 = vpop.f32.mrb[0].mxu0
        %v746 = vpop.f32.mrb[0].mxu0
        %v747 = vadd.f32 0.0, %v746
        %v748 = vpop.f32.mrb[0].mxu0
        %749 = vmatprep.mubr.bf16.mxu0 0
        %750 = vmatmul.mubr.bf16.gmra.mrb[0].mxu0 %v632
        %v751 = vpop.f32.mrb[0].mxu0
        %v752 = vadd.f32 0.0, %v751
        %v753 = vpop.f32.mrb[0].mxu0
        %v754 = vpop.f32.mrb[0].mxu0
        %v755 = vadd.f32 0.0, %v754
        %v756 = vpop.f32.mrb[0].mxu0
        %757 = vmatprep.mubr.bf16.mxu0 0
        %758 = vmatmul.mubr.bf16.gmra.mrb[0].mxu0 %v633
        %v759 = vpop.f32.mrb[0].mxu0
        %v760 = vadd.f32 0.0, %v759
        %v761 = vpop.f32.mrb[0].mxu0
        %v762 = vpop.f32.mrb[0].mxu0
        %v763 = vadd.f32 0.0, %v762
        %v764 = vpop.f32.mrb[0].mxu0
        %765 = vmatprep.mubr.bf16.mxu0 0
        %766 = vmatmul.mubr.bf16.gmra.mrb[0].mxu0 %v634
        %v767 = vpop.f32.mrb[0].mxu0
        %v768 = vadd.f32 0.0, %v767
        %v769 = vpop.f32.mrb[0].mxu0
        %v770 = vpop.f32.mrb[0].mxu0
        %v771 = vadd.f32 0.0, %v770
        %v772 = vpop.f32.mrb[0].mxu0
        %773 = vmatprep.mubr.bf16.mxu0 0
        %774 = vmatmul.mubr.bf16.gmra.mrb[0].mxu0 %v635
        %v775 = vpop.f32.mrb[0].mxu0
        %v776 = vadd.f32 0.0, %v775
        %v777 = vpop.f32.mrb[0].mxu0
        %v778 = vpop.f32.mrb[0].mxu0
        %v779 = vadd.f32 0.0, %v778
        %v780 = vpop.f32.mrb[0].mxu0
        %781 = vmatprep.mubr.bf16.mxu0 0
        %782 = vmatmul.mubr.bf16.gmra.mrb[0].mxu0 %v636
        %v783 = vpop.f32.mrb[0].mxu0
        %v784 = vadd.f32 0.0, %v783
        %v785 = vpop.f32.mrb[0].mxu0
        %v786 = vpop.f32.mrb[0].mxu0
        %v787 = vadd.f32 0.0, %v786
        %v788 = vpop.f32.mrb[0].mxu0
        %789 = vdwg.mxu0
        %v790 = vadd.f32 %v549, %v728
        %v791 = vadd.f32 %v550, %v731
        %v792 = vadd.f32 %v551, %v736
        %v793 = vadd.f32 %v552, %v739
        %v794 = vadd.f32 %v553, %v744
        %v795 = vadd.f32 %v554, %v747
        %v796 = vadd.f32 %v555, %v752
        %v797 = vadd.f32 %v556, %v755
        %v798 = vadd.f32 %v557, %v760
        %v799 = vadd.f32 %v558, %v763
        %v800 = vadd.f32 %v559, %v768
        %v801 = vadd.f32 %v560, %v771
        %v802 = vadd.f32 %v561, %v776
        %v803 = vadd.f32 %v562, %v779
        %v804 = vadd.f32 %v563, %v784
        %v805 = vadd.f32 %v564, %v787
        %806 = vst [vmem:[#allocation2] sm:$0xff] %v790
        %807 = vst [vmem:[#allocation2 + $0x8] sm:$0xff] %v791
        %808 = vst [vmem:[#allocation2 + $0x10] sm:$0xff] %v792
        %809 = vst [vmem:[#allocation2 + $0x18] sm:$0xff] %v793
        %810 = vst [vmem:[#allocation2 + $0x20] sm:$0xff] %v794
        %811 = vst [vmem:[#allocation2 + $0x28] sm:$0xff] %v795
        %812 = vst [vmem:[#allocation2 + $0x30] sm:$0xff] %v796
        %813 = vst [vmem:[#allocation2 + $0x38] sm:$0xff] %v797
        %814 = vst [vmem:[#allocation2 + $0x40] sm:$0xff] %v798
        %815 = vst [vmem:[#allocation2 + $0x48] sm:$0xff] %v799
        %816 = vst [vmem:[#allocation2 + $0x50] sm:$0xff] %v800
        %817 = vst [vmem:[#allocation2 + $0x58] sm:$0xff] %v801
        %818 = vst [vmem:[#allocation2 + $0x60] sm:$0xff] %v802
        %819 = vst [vmem:[#allocation2 + $0x68] sm:$0xff] %v803
        %820 = vst [vmem:[#allocation2 + $0x70] sm:$0xff] %v804
        %821 = vst [vmem:[#allocation2 + $0x78] sm:$0xff] %v805
        %p822 = scmp.eq.s32.totalorder %s35, 1
        // Predicated region
        $region106: #{tpu_custom_call.1} parent=84 // pred_check
          %p823 = pneg %p822
        $region107: #{tpu_custom_call.1} parent=84 // pred_check_branch
          %825 = sbr.rel (%p823) target = $region109
        $region108: #{tpu_custom_call.1} parent=84 // pred_region
          %v826 = vld [vmem:[%s524] sm:$0xff]
          %v827 = vld [vmem:[%s524 + $0x8] sm:$0xff]
          %v828 = vld [vmem:[%s524 + $0x10] sm:$0xff]
          %v829 = vld [vmem:[%s524 + $0x18] sm:$0xff]
          %v830 = vld [vmem:[%s524 + $0x20] sm:$0xff]
          %v831 = vld [vmem:[%s524 + $0x28] sm:$0xff]
          %v832 = vld [vmem:[%s524 + $0x30] sm:$0xff]
          %v833 = vld [vmem:[%s524 + $0x38] sm:$0xff]
          %v834 = vld [vmem:[%s524 + $0x40] sm:$0xff]
          %v835 = vld [vmem:[%s524 + $0x48] sm:$0xff]
          %v836 = vld [vmem:[%s524 + $0x50] sm:$0xff]
          %v837 = vld [vmem:[%s524 + $0x58] sm:$0xff]
          %v838 = vld [vmem:[%s524 + $0x60] sm:$0xff]
          %v839 = vld [vmem:[%s524 + $0x68] sm:$0xff]
          %v840 = vld [vmem:[%s524 + $0x70] sm:$0xff]
          %v841 = vld [vmem:[%s524 + $0x78] sm:$0xff]
          %v842 = vld [vmem:[#allocation2] sm:$0xff]
          %v843 = vld [vmem:[#allocation2 + $0x8] sm:$0xff]
          %v844 = vld [vmem:[#allocation2 + $0x10] sm:$0xff]
          %v845 = vld [vmem:[#allocation2 + $0x18] sm:$0xff]
          %v846 = vld [vmem:[#allocation2 + $0x20] sm:$0xff]
          %v847 = vld [vmem:[#allocation2 + $0x28] sm:$0xff]
          %v848 = vld [vmem:[#allocation2 + $0x30] sm:$0xff]
          %v849 = vld [vmem:[#allocation2 + $0x38] sm:$0xff]
          %v850 = vld [vmem:[#allocation2 + $0x40] sm:$0xff]
          %v851 = vld [vmem:[#allocation2 + $0x48] sm:$0xff]
          %v852 = vld [vmem:[#allocation2 + $0x50] sm:$0xff]
          %v853 = vld [vmem:[#allocation2 + $0x58] sm:$0xff]
          %v854 = vld [vmem:[#allocation2 + $0x60] sm:$0xff]
          %v855 = vld [vmem:[#allocation2 + $0x68] sm:$0xff]
          %v856 = vld [vmem:[#allocation2 + $0x70] sm:$0xff]
          %v857 = vld [vmem:[#allocation2 + $0x78] sm:$0xff]
          %859 = vset.pattern.permute.xlu0 0
          %860 = vperm.xlu0 %859, %v826
          %v861 = vpop.permute.xlu0 %860
          %864 = vset.pattern.permute.xlu0 0
          %865 = vperm.xlu0 %864, %v827
          %v866 = vpop.permute.xlu0 %865
          %869 = vset.pattern.permute.xlu0 0
          %870 = vperm.xlu0 %869, %v828
          %v871 = vpop.permute.xlu0 %870
          %874 = vset.pattern.permute.xlu0 0
          %875 = vperm.xlu0 %874, %v829
          %v876 = vpop.permute.xlu0 %875
          %879 = vset.pattern.permute.xlu0 0
          %880 = vperm.xlu0 %879, %v830
          %v881 = vpop.permute.xlu0 %880
          %884 = vset.pattern.permute.xlu0 0
          %885 = vperm.xlu0 %884, %v831
          %v886 = vpop.permute.xlu0 %885
          %889 = vset.pattern.permute.xlu0 0
          %890 = vperm.xlu0 %889, %v832
          %v891 = vpop.permute.xlu0 %890
          %894 = vset.pattern.permute.xlu0 0
          %895 = vperm.xlu0 %894, %v833
          %v896 = vpop.permute.xlu0 %895
          %899 = vset.pattern.permute.xlu0 0
          %900 = vperm.xlu0 %899, %v834
          %v901 = vpop.permute.xlu0 %900
          %904 = vset.pattern.permute.xlu0 0
          %905 = vperm.xlu0 %904, %v835
          %v906 = vpop.permute.xlu0 %905
          %909 = vset.pattern.permute.xlu0 0
          %910 = vperm.xlu0 %909, %v836
          %v911 = vpop.permute.xlu0 %910
          %914 = vset.pattern.permute.xlu0 0
          %915 = vperm.xlu0 %914, %v837
          %v916 = vpop.permute.xlu0 %915
          %919 = vset.pattern.permute.xlu0 0
          %920 = vperm.xlu0 %919, %v838
          %v921 = vpop.permute.xlu0 %920
          %924 = vset.pattern.permute.xlu0 0
          %925 = vperm.xlu0 %924, %v839
          %v926 = vpop.permute.xlu0 %925
          %929 = vset.pattern.permute.xlu0 0
          %930 = vperm.xlu0 %929, %v840
          %v931 = vpop.permute.xlu0 %930
          %934 = vset.pattern.permute.xlu0 0
          %935 = vperm.xlu0 %934, %v841
          %v936 = vpop.permute.xlu0 %935
          %v938 = vmul.f32 %v861, %v842
          %v939 = vmul.f32 %v866, %v843
          %v940 = vmul.f32 %v871, %v844
          %v941 = vmul.f32 %v876, %v845
          %v942 = vmul.f32 %v881, %v846
          %v943 = vmul.f32 %v886, %v847
          %v944 = vmul.f32 %v891, %v848
          %v945 = vmul.f32 %v896, %v849
          %v946 = vmul.f32 %v901, %v850
          %v947 = vmul.f32 %v906, %v851
          %v948 = vmul.f32 %v911, %v852
          %v949 = vmul.f32 %v916, %v853
          %v950 = vmul.f32 %v921, %v854
          %v951 = vmul.f32 %v926, %v855
          %v952 = vmul.f32 %v931, %v856
          %v953 = vmul.f32 %v936, %v857
          %v954 = vld [vmem:[#allocation7] sm:$0xff]
          %v955 = vld [vmem:[#allocation7 + $0x8] sm:$0xff]
          %v956 = vld [vmem:[#allocation7 + $0x10] sm:$0xff]
          %v957 = vld [vmem:[#allocation7 + $0x18] sm:$0xff]
          %v958 = vld [vmem:[#allocation7 + $0x20] sm:$0xff]
          %v959 = vld [vmem:[#allocation7 + $0x28] sm:$0xff]
          %v960 = vld [vmem:[#allocation7 + $0x30] sm:$0xff]
          %v961 = vld [vmem:[#allocation7 + $0x38] sm:$0xff]
          %v962 = vld [vmem:[#allocation7 + $0x40] sm:$0xff]
          %v963 = vld [vmem:[#allocation7 + $0x48] sm:$0xff]
          %v964 = vld [vmem:[#allocation7 + $0x50] sm:$0xff]
          %v965 = vld [vmem:[#allocation7 + $0x58] sm:$0xff]
          %v966 = vld [vmem:[#allocation7 + $0x60] sm:$0xff]
          %v967 = vld [vmem:[#allocation7 + $0x68] sm:$0xff]
          %v968 = vld [vmem:[#allocation7 + $0x70] sm:$0xff]
          %v969 = vld [vmem:[#allocation7 + $0x78] sm:$0xff]
          %v970 = vld [vmem:[%s4] sm:$0x1]
          %v972 = vlaneseq
          %v973 = vshrl.u32 %v972, 7
          %v974 = vsub.s32 0, %v973
          %v975 = vrot.slane %v970, %v974
          %977 = vmatprep.subr.mxu0 0.0
          %978 = vmatpush1.msra.mxu0 %v954
          %979 = vmatprep.subr.mxu0 0.0
          %980 = vmatpush1.msra.mxu0 %v955
          %981 = vmatprep.subr.mxu0 0.0
          %982 = vmatpush1.msra.mxu0 %v956
          %983 = vmatprep.subr.mxu0 0.0
          %984 = vmatpush1.msra.mxu0 %v957
          %985 = vmatprep.subr.mxu0 0.0
          %986 = vmatpush1.msra.mxu0 %v958
          %987 = vmatprep.subr.mxu0 0.0
          %988 = vmatpush1.msra.mxu0 %v959
          %989 = vmatprep.subr.mxu0 0.0
          %990 = vmatpush1.msra.mxu0 %v960
          %991 = vmatprep.subr.mxu0 0.0
          %992 = vmatpush1.msra.mxu0 %v961
          %993 = vmatprep.subr.mxu0 0.0
          %994 = vmatpush1.msra.mxu0 %v962
          %995 = vmatprep.subr.mxu0 0.0
          %996 = vmatpush1.msra.mxu0 %v963
          %997 = vmatprep.subr.mxu0 0.0
          %998 = vmatpush1.msra.mxu0 %v964
          %999 = vmatprep.subr.mxu0 0.0
          %1000 = vmatpush1.msra.mxu0 %v965
          %1001 = vmatprep.subr.mxu0 0.0
          %1002 = vmatpush1.msra.mxu0 %v966
          %1003 = vmatprep.subr.mxu0 0.0
          %1004 = vmatpush1.msra.mxu0 %v967
          %1005 = vmatprep.subr.mxu0 0.0
          %1006 = vmatpush1.msra.mxu0 %v968
          %1007 = vmatprep.subr.mxu0 0.0
          %1008 = vmatpush1.msra.mxu0 %v969
          %1009 = vmatprep.subr.mxu0 0.0
          %1010 = vmatpush1.msra.mxu0 0.0
          %1011 = vmatprep.subr.mxu0 0.0
          %1012 = vmatpush1.msra.mxu0 0.0
          %1013 = vmatprep.subr.mxu0 0.0
          %1014 = vmatpush1.msra.mxu0 0.0
          %1015 = vmatprep.subr.mxu0 0.0
          %1016 = vmatpush1.msra.mxu0 0.0
          %1017 = vmatprep.subr.mxu0 0.0
          %1018 = vmatpush1.msra.mxu0 0.0
          %1019 = vmatprep.subr.mxu0 0.0
          %1020 = vmatpush1.msra.mxu0 0.0
          %1021 = vmatprep.subr.mxu0 0.0
          %1022 = vmatpush1.msra.mxu0 0.0
          %1023 = vmatprep.subr.mxu0 0.0
          %1024 = vmatpush1.msra.mxu0 0.0
          %1025 = vmatprep.subr.mxu0 0.0
          %1026 = vmatpush1.msra.mxu0 0.0
          %1027 = vmatprep.subr.mxu0 0.0
          %1028 = vmatpush1.msra.mxu0 0.0
          %1029 = vmatprep.subr.mxu0 0.0
          %1030 = vmatpush1.msra.mxu0 0.0
          %1031 = vmatprep.subr.mxu0 0.0
          %1032 = vmatpush1.msra.mxu0 0.0
          %1033 = vmatprep.subr.mxu0 0.0
          %1034 = vmatpush1.msra.mxu0 0.0
          %1035 = vmatprep.subr.mxu0 0.0
          %1036 = vmatpush1.msra.mxu0 0.0
          %1037 = vmatprep.subr.mxu0 0.0
          %1038 = vmatpush1.msra.mxu0 0.0
          %1039 = vmatprep.subr.mxu0 0.0
          %1040 = vmatpush1.msra.mxu0 0.0
          %1041 = vmatprep.mubr.f32.mxu0 0.0
          %1042 = vmatmul.mubr.f32.gmra.mrb[0].mxu0 %v938
          %v1043 = vpop.f32.mrb[0].mxu0
          %v1044 = vadd.f32 %v975, %v1043
          %v1045 = vpop.f32.mrb[0].mxu0
          %1046 = vmatprep.mubr.f32.mxu0 0.0
          %1047 = vmatmul.mubr.f32.gmra.mrb[0].mxu0 %v939
          %v1048 = vpop.f32.mrb[0].mxu0
          %v1049 = vadd.f32 %v975, %v1048
          %v1050 = vpop.f32.mrb[0].mxu0
          %1051 = vmatprep.mubr.f32.mxu0 0.0
          %1052 = vmatmul.mubr.f32.gmra.mrb[0].mxu0 %v940
          %v1053 = vpop.f32.mrb[0].mxu0
          %v1054 = vadd.f32 %v975, %v1053
          %v1055 = vpop.f32.mrb[0].mxu0
          %1056 = vmatprep.mubr.f32.mxu0 0.0
          %1057 = vmatmul.mubr.f32.gmra.mrb[0].mxu0 %v941
          %v1058 = vpop.f32.mrb[0].mxu0
          %v1059 = vadd.f32 %v975, %v1058
          %v1060 = vpop.f32.mrb[0].mxu0
          %1061 = vmatprep.mubr.f32.mxu0 0.0
          %1062 = vmatmul.mubr.f32.gmra.mrb[0].mxu0 %v942
          %v1063 = vpop.f32.mrb[0].mxu0
          %v1064 = vadd.f32 %v975, %v1063
          %v1065 = vpop.f32.mrb[0].mxu0
          %1066 = vmatprep.mubr.f32.mxu0 0.0
          %1067 = vmatmul.mubr.f32.gmra.mrb[0].mxu0 %v943
          %v1068 = vpop.f32.mrb[0].mxu0
          %v1069 = vadd.f32 %v975, %v1068
          %v1070 = vpop.f32.mrb[0].mxu0
          %1071 = vmatprep.mubr.f32.mxu0 0.0
          %1072 = vmatmul.mubr.f32.gmra.mrb[0].mxu0 %v944
          %v1073 = vpop.f32.mrb[0].mxu0
          %v1074 = vadd.f32 %v975, %v1073
          %v1075 = vpop.f32.mrb[0].mxu0
          %1076 = vmatprep.mubr.f32.mxu0 0.0
          %1077 = vmatmul.mubr.f32.gmra.mrb[0].mxu0 %v945
          %v1078 = vpop.f32.mrb[0].mxu0
          %v1079 = vadd.f32 %v975, %v1078
          %v1080 = vpop.f32.mrb[0].mxu0
          %1081 = vmatprep.mubr.f32.mxu0 0.0
          %1082 = vmatmul.mubr.f32.gmra.mrb[0].mxu0 %v946
          %v1083 = vpop.f32.mrb[0].mxu0
          %v1084 = vadd.f32 %v975, %v1083
          %v1085 = vpop.f32.mrb[0].mxu0
          %1086 = vmatprep.mubr.f32.mxu0 0.0
          %1087 = vmatmul.mubr.f32.gmra.mrb[0].mxu0 %v947
          %v1088 = vpop.f32.mrb[0].mxu0
          %v1089 = vadd.f32 %v975, %v1088
          %v1090 = vpop.f32.mrb[0].mxu0
          %1091 = vmatprep.mubr.f32.mxu0 0.0
          %1092 = vmatmul.mubr.f32.gmra.mrb[0].mxu0 %v948
          %v1093 = vpop.f32.mrb[0].mxu0
          %v1094 = vadd.f32 %v975, %v1093
          %v1095 = vpop.f32.mrb[0].mxu0
          %1096 = vmatprep.mubr.f32.mxu0 0.0
          %1097 = vmatmul.mubr.f32.gmra.mrb[0].mxu0 %v949
          %v1098 = vpop.f32.mrb[0].mxu0
          %v1099 = vadd.f32 %v975, %v1098
          %v1100 = vpop.f32.mrb[0].mxu0
          %1101 = vmatprep.mubr.f32.mxu0 0.0
          %1102 = vmatmul.mubr.f32.gmra.mrb[0].mxu0 %v950
          %v1103 = vpop.f32.mrb[0].mxu0
          %v1104 = vadd.f32 %v975, %v1103
          %v1105 = vpop.f32.mrb[0].mxu0
          %1106 = vmatprep.mubr.f32.mxu0 0.0
          %1107 = vmatmul.mubr.f32.gmra.mrb[0].mxu0 %v951
          %v1108 = vpop.f32.mrb[0].mxu0
          %v1109 = vadd.f32 %v975, %v1108
          %v1110 = vpop.f32.mrb[0].mxu0
          %1111 = vmatprep.mubr.f32.mxu0 0.0
          %1112 = vmatmul.mubr.f32.gmra.mrb[0].mxu0 %v952
          %v1113 = vpop.f32.mrb[0].mxu0
          %v1114 = vadd.f32 %v975, %v1113
          %v1115 = vpop.f32.mrb[0].mxu0
          %1116 = vmatprep.mubr.f32.mxu0 0.0
          %1117 = vmatmul.mubr.f32.gmra.mrb[0].mxu0 %v953
          %v1118 = vpop.f32.mrb[0].mxu0
          %v1119 = vadd.f32 %v975, %v1118
          %v1120 = vpop.f32.mrb[0].mxu0
          %1121 = vdwg.mxu0
          %v1122 = vmax.f32 %v1044, 0.0
          %v1123 = vmax.f32 %v1049, 0.0
          %v1124 = vmax.f32 %v1054, 0.0
          %v1125 = vmax.f32 %v1059, 0.0
          %v1126 = vmax.f32 %v1064, 0.0
          %v1127 = vmax.f32 %v1069, 0.0
          %v1128 = vmax.f32 %v1074, 0.0
          %v1129 = vmax.f32 %v1079, 0.0
          %v1130 = vmax.f32 %v1084, 0.0
          %v1131 = vmax.f32 %v1089, 0.0
          %v1132 = vmax.f32 %v1094, 0.0
          %v1133 = vmax.f32 %v1099, 0.0
          %v1134 = vmax.f32 %v1104, 0.0
          %v1135 = vmax.f32 %v1109, 0.0
          %v1136 = vmax.f32 %v1114, 0.0
          %v1137 = vmax.f32 %v1119, 0.0
          %1138 = vst [vmem:[%s510] sm:$0xff] %v1122
          %1139 = vst [vmem:[%s510 + $0x8] sm:$0xff] %v1123
          %1140 = vst [vmem:[%s510 + $0x10] sm:$0xff] %v1124
          %1141 = vst [vmem:[%s510 + $0x18] sm:$0xff] %v1125
          %1142 = vst [vmem:[%s510 + $0x20] sm:$0xff] %v1126
          %1143 = vst [vmem:[%s510 + $0x28] sm:$0xff] %v1127
          %1144 = vst [vmem:[%s510 + $0x30] sm:$0xff] %v1128
          %1145 = vst [vmem:[%s510 + $0x38] sm:$0xff] %v1129
          %1146 = vst [vmem:[%s510 + $0x40] sm:$0xff] %v1130
          %1147 = vst [vmem:[%s510 + $0x48] sm:$0xff] %v1131
          %1148 = vst [vmem:[%s510 + $0x50] sm:$0xff] %v1132
          %1149 = vst [vmem:[%s510 + $0x58] sm:$0xff] %v1133
          %1150 = vst [vmem:[%s510 + $0x60] sm:$0xff] %v1134
          %1151 = vst [vmem:[%s510 + $0x68] sm:$0xff] %v1135
          %1152 = vst [vmem:[%s510 + $0x70] sm:$0xff] %v1136
          %1153 = vst [vmem:[%s510 + $0x78] sm:$0xff] %v1137
          %v1154 = vld [vmem:[#allocation9] sm:$0xff]
          %v1155 = vld [vmem:[#allocation9 + $0x8] sm:$0xff]
          %v1156 = vld [vmem:[#allocation9 + $0x10] sm:$0xff]
          %v1157 = vld [vmem:[#allocation9 + $0x18] sm:$0xff]
          %v1158 = vld [vmem:[#allocation9 + $0x20] sm:$0xff]
          %v1159 = vld [vmem:[#allocation9 + $0x28] sm:$0xff]
          %v1160 = vld [vmem:[#allocation9 + $0x30] sm:$0xff]
          %v1161 = vld [vmem:[#allocation9 + $0x38] sm:$0xff]
          %v1162 = vld [vmem:[#allocation9 + $0x40] sm:$0xff]
          %v1163 = vld [vmem:[#allocation9 + $0x48] sm:$0xff]
          %v1164 = vld [vmem:[#allocation9 + $0x50] sm:$0xff]
          %v1165 = vld [vmem:[#allocation9 + $0x58] sm:$0xff]
          %v1166 = vld [vmem:[#allocation9 + $0x60] sm:$0xff]
          %v1167 = vld [vmem:[#allocation9 + $0x68] sm:$0xff]
          %v1168 = vld [vmem:[#allocation9 + $0x70] sm:$0xff]
          %v1169 = vld [vmem:[#allocation9 + $0x78] sm:$0xff]
          %v1170 = vld [vmem:[%s6] sm:$0x1]
          %v1172 = vlaneseq
          %v1173 = vshrl.u32 %v1172, 7
          %v1174 = vsub.s32 0, %v1173
          %v1175 = vrot.slane %v1170, %v1174
          %1177 = vmatprep.subr.mxu0 0.0
          %1178 = vmatpush1.msra.mxu0 %v1154
          %1179 = vmatprep.subr.mxu0 0.0
          %1180 = vmatpush1.msra.mxu0 %v1155
          %1181 = vmatprep.subr.mxu0 0.0
          %1182 = vmatpush1.msra.mxu0 %v1156
          %1183 = vmatprep.subr.mxu0 0.0
          %1184 = vmatpush1.msra.mxu0 %v1157
          %1185 = vmatprep.subr.mxu0 0.0
          %1186 = vmatpush1.msra.mxu0 %v1158
          %1187 = vmatprep.subr.mxu0 0.0
          %1188 = vmatpush1.msra.mxu0 %v1159
          %1189 = vmatprep.subr.mxu0 0.0
          %1190 = vmatpush1.msra.mxu0 %v1160
          %1191 = vmatprep.subr.mxu0 0.0
          %1192 = vmatpush1.msra.mxu0 %v1161
          %1193 = vmatprep.subr.mxu0 0.0
          %1194 = vmatpush1.msra.mxu0 %v1162
          %1195 = vmatprep.subr.mxu0 0.0
          %1196 = vmatpush1.msra.mxu0 %v1163
          %1197 = vmatprep.subr.mxu0 0.0
          %1198 = vmatpush1.msra.mxu0 %v1164
          %1199 = vmatprep.subr.mxu0 0.0
          %1200 = vmatpush1.msra.mxu0 %v1165
          %1201 = vmatprep.subr.mxu0 0.0
          %1202 = vmatpush1.msra.mxu0 %v1166
          %1203 = vmatprep.subr.mxu0 0.0
          %1204 = vmatpush1.msra.mxu0 %v1167
          %1205 = vmatprep.subr.mxu0 0.0
          %1206 = vmatpush1.msra.mxu0 %v1168
          %1207 = vmatprep.subr.mxu0 0.0
          %1208 = vmatpush1.msra.mxu0 %v1169
          %1209 = vmatprep.subr.mxu0 0.0
          %1210 = vmatpush1.msra.mxu0 0.0
          %1211 = vmatprep.subr.mxu0 0.0
          %1212 = vmatpush1.msra.mxu0 0.0
          %1213 = vmatprep.subr.mxu0 0.0
          %1214 = vmatpush1.msra.mxu0 0.0
          %1215 = vmatprep.subr.mxu0 0.0
          %1216 = vmatpush1.msra.mxu0 0.0
          %1217 = vmatprep.subr.mxu0 0.0
          %1218 = vmatpush1.msra.mxu0 0.0
          %1219 = vmatprep.subr.mxu0 0.0
          %1220 = vmatpush1.msra.mxu0 0.0
          %1221 = vmatprep.subr.mxu0 0.0
          %1222 = vmatpush1.msra.mxu0 0.0
          %1223 = vmatprep.subr.mxu0 0.0
          %1224 = vmatpush1.msra.mxu0 0.0
          %1225 = vmatprep.subr.mxu0 0.0
          %1226 = vmatpush1.msra.mxu0 0.0
          %1227 = vmatprep.subr.mxu0 0.0
          %1228 = vmatpush1.msra.mxu0 0.0
          %1229 = vmatprep.subr.mxu0 0.0
          %1230 = vmatpush1.msra.mxu0 0.0
          %1231 = vmatprep.subr.mxu0 0.0
          %1232 = vmatpush1.msra.mxu0 0.0
          %1233 = vmatprep.subr.mxu0 0.0
          %1234 = vmatpush1.msra.mxu0 0.0
          %1235 = vmatprep.subr.mxu0 0.0
          %1236 = vmatpush1.msra.mxu0 0.0
          %1237 = vmatprep.subr.mxu0 0.0
          %1238 = vmatpush1.msra.mxu0 0.0
          %1239 = vmatprep.subr.mxu0 0.0
          %1240 = vmatpush1.msra.mxu0 0.0
          %1241 = vmatprep.mubr.f32.mxu0 0.0
          %1242 = vmatmul.mubr.f32.gmra.mrb[0].mxu0 %v1122
          %v1243 = vpop.f32.mrb[0].mxu0
          %v1244 = vadd.f32 %v1175, %v1243
          %v1245 = vpop.f32.mrb[0].mxu0
          %1246 = vmatprep.mubr.f32.mxu0 0.0
          %1247 = vmatmul.mubr.f32.gmra.mrb[0].mxu0 %v1123
          %v1248 = vpop.f32.mrb[0].mxu0
          %v1249 = vadd.f32 %v1175, %v1248
          %v1250 = vpop.f32.mrb[0].mxu0
          %1251 = vmatprep.mubr.f32.mxu0 0.0
          %1252 = vmatmul.mubr.f32.gmra.mrb[0].mxu0 %v1124
          %v1253 = vpop.f32.mrb[0].mxu0
          %v1254 = vadd.f32 %v1175, %v1253
          %v1255 = vpop.f32.mrb[0].mxu0
          %1256 = vmatprep.mubr.f32.mxu0 0.0
          %1257 = vmatmul.mubr.f32.gmra.mrb[0].mxu0 %v1125
          %v1258 = vpop.f32.mrb[0].mxu0
          %v1259 = vadd.f32 %v1175, %v1258
          %v1260 = vpop.f32.mrb[0].mxu0
          %1261 = vmatprep.mubr.f32.mxu0 0.0
          %1262 = vmatmul.mubr.f32.gmra.mrb[0].mxu0 %v1126
          %v1263 = vpop.f32.mrb[0].mxu0
          %v1264 = vadd.f32 %v1175, %v1263
          %v1265 = vpop.f32.mrb[0].mxu0
          %1266 = vmatprep.mubr.f32.mxu0 0.0
          %1267 = vmatmul.mubr.f32.gmra.mrb[0].mxu0 %v1127
          %v1268 = vpop.f32.mrb[0].mxu0
          %v1269 = vadd.f32 %v1175, %v1268
          %v1270 = vpop.f32.mrb[0].mxu0
          %1271 = vmatprep.mubr.f32.mxu0 0.0
          %1272 = vmatmul.mubr.f32.gmra.mrb[0].mxu0 %v1128
          %v1273 = vpop.f32.mrb[0].mxu0
          %v1274 = vadd.f32 %v1175, %v1273
          %v1275 = vpop.f32.mrb[0].mxu0
          %1276 = vmatprep.mubr.f32.mxu0 0.0
          %1277 = vmatmul.mubr.f32.gmra.mrb[0].mxu0 %v1129
          %v1278 = vpop.f32.mrb[0].mxu0
          %v1279 = vadd.f32 %v1175, %v1278
          %v1280 = vpop.f32.mrb[0].mxu0
          %1281 = vmatprep.mubr.f32.mxu0 0.0
          %1282 = vmatmul.mubr.f32.gmra.mrb[0].mxu0 %v1130
          %v1283 = vpop.f32.mrb[0].mxu0
          %v1284 = vadd.f32 %v1175, %v1283
          %v1285 = vpop.f32.mrb[0].mxu0
          %1286 = vmatprep.mubr.f32.mxu0 0.0
          %1287 = vmatmul.mubr.f32.gmra.mrb[0].mxu0 %v1131
          %v1288 = vpop.f32.mrb[0].mxu0
          %v1289 = vadd.f32 %v1175, %v1288
          %v1290 = vpop.f32.mrb[0].mxu0
          %1291 = vmatprep.mubr.f32.mxu0 0.0
          %1292 = vmatmul.mubr.f32.gmra.mrb[0].mxu0 %v1132
          %v1293 = vpop.f32.mrb[0].mxu0
          %v1294 = vadd.f32 %v1175, %v1293
          %v1295 = vpop.f32.mrb[0].mxu0
          %1296 = vmatprep.mubr.f32.mxu0 0.0
          %1297 = vmatmul.mubr.f32.gmra.mrb[0].mxu0 %v1133
          %v1298 = vpop.f32.mrb[0].mxu0
          %v1299 = vadd.f32 %v1175, %v1298
          %v1300 = vpop.f32.mrb[0].mxu0
          %1301 = vmatprep.mubr.f32.mxu0 0.0
          %1302 = vmatmul.mubr.f32.gmra.mrb[0].mxu0 %v1134
          %v1303 = vpop.f32.mrb[0].mxu0
          %v1304 = vadd.f32 %v1175, %v1303
          %v1305 = vpop.f32.mrb[0].mxu0
          %1306 = vmatprep.mubr.f32.mxu0 0.0
          %1307 = vmatmul.mubr.f32.gmra.mrb[0].mxu0 %v1135
          %v1308 = vpop.f32.mrb[0].mxu0
          %v1309 = vadd.f32 %v1175, %v1308
          %v1310 = vpop.f32.mrb[0].mxu0
          %1311 = vmatprep.mubr.f32.mxu0 0.0
          %1312 = vmatmul.mubr.f32.gmra.mrb[0].mxu0 %v1136
          %v1313 = vpop.f32.mrb[0].mxu0
          %v1314 = vadd.f32 %v1175, %v1313
          %v1315 = vpop.f32.mrb[0].mxu0
          %1316 = vmatprep.mubr.f32.mxu0 0.0
          %1317 = vmatmul.mubr.f32.gmra.mrb[0].mxu0 %v1137
          %v1318 = vpop.f32.mrb[0].mxu0
          %v1319 = vadd.f32 %v1175, %v1318
          %v1320 = vpop.f32.mrb[0].mxu0
          %1321 = vdwg.mxu0
          %1322 = vst [vmem:[%s517] sm:$0xff] %v1244
          %1323 = vst [vmem:[%s517 + $0x8] sm:$0xff] %v1249
          %1324 = vst [vmem:[%s517 + $0x10] sm:$0xff] %v1254
          %1325 = vst [vmem:[%s517 + $0x18] sm:$0xff] %v1259
          %1326 = vst [vmem:[%s517 + $0x20] sm:$0xff] %v1264
          %1327 = vst [vmem:[%s517 + $0x28] sm:$0xff] %v1269
          %1328 = vst [vmem:[%s517 + $0x30] sm:$0xff] %v1274
          %1329 = vst [vmem:[%s517 + $0x38] sm:$0xff] %v1279
          %1330 = vst [vmem:[%s517 + $0x40] sm:$0xff] %v1284
          %1331 = vst [vmem:[%s517 + $0x48] sm:$0xff] %v1289
          %1332 = vst [vmem:[%s517 + $0x50] sm:$0xff] %v1294
          %1333 = vst [vmem:[%s517 + $0x58] sm:$0xff] %v1299
          %1334 = vst [vmem:[%s517 + $0x60] sm:$0xff] %v1304
          %1335 = vst [vmem:[%s517 + $0x68] sm:$0xff] %v1309
          %1336 = vst [vmem:[%s517 + $0x70] sm:$0xff] %v1314
          %1337 = vst [vmem:[%s517 + $0x78] sm:$0xff] %v1319
        $region109: #{tpu_custom_call.1} parent=84 // pred_fallthru
          _
        %s1338 = sand.u32 %s214, 1
        %s1339 = scalar_lea.sflag [#allocation6], %s1338
        %s1340 = sand.u32 %s214, 1
        %s1341 = smul.addr %s1340, 128
        %s1342 = scalar_lea.vmem [#allocation10], %s1341
        %s1343 = sand.u32 %s240, 1
        %s1344 = scalar_lea.sflag [#allocation12], %s1343
        %s1345 = sand.u32 %s240, 1
        %s1346 = smul.addr %s1345, 128
        %s1347 = scalar_lea.vmem [#allocation11], %s1346
        // Predicated region
        $region110: #{tpu_custom_call.1} parent=84 // pred_check
          %p1348 = pneg %p224
        $region111: #{tpu_custom_call.1} parent=84 // pred_check_branch
          %1350 = sbr.rel (%p1348) target = $region113
        $region112: #{tpu_custom_call.1} parent=84 // pred_region
          %s1351 = smul.u32 16, %s34
          %s1353 = ssub.s32 2048, 2048
          %1354 = vsyncadd %s1339, %s1353
          %s1355 = smul.addr %s1351, 128
          %s1356 = scalar_lea.hbm %s7, %s1355
          %s1357 = sshll.u32 %s1342, 4
          %s1358 = int_to_ptr.vmem [resolvable:$true] %s1357
          %1363 = dma.vmem_to_hbm [thread:$0]  %s1358, 2048, %s1356, %s1339, 128, 128, 8
        $region113: #{tpu_custom_call.1} parent=84 // pred_fallthru
          _
        // Predicated region
        $region114: #{tpu_custom_call.1} parent=84 // pred_check
          %p1364 = pneg %p250
        $region115: #{tpu_custom_call.1} parent=84 // pred_check_branch
          %1366 = sbr.rel (%p1364) target = $region117
        $region116: #{tpu_custom_call.1} parent=84 // pred_region
          %s1367 = smul.u32 16, %s34
          %s1369 = ssub.s32 2048, 2048
          %1370 = vsyncadd %s1344, %s1369
          %s1371 = smul.addr %s1367, 128
          %s1372 = scalar_lea.hbm %s8, %s1371
          %s1373 = sshll.u32 %s1347, 4
          %s1374 = int_to_ptr.vmem [resolvable:$true] %s1373
          %1379 = dma.vmem_to_hbm [thread:$0]  %s1374, 2048, %s1372, %s1344, 128, 128, 8
        $region117: #{tpu_custom_call.1} parent=84 // pred_fallthru
          _
      $region85: #{tpu_custom_call.1} parent=5 // pred_fallthru
        _
      %p1380 = scmp.le.s32.totalorder 2, %s25
      // Predicated region
      $region118: #{tpu_custom_call.1} parent=5 // pred_check
        %p1381 = pneg %p1380
      $region119: #{tpu_custom_call.1} parent=5 // pred_check_branch
        %1383 = sbr.rel (%p1381) target = $region121
      $region120: #{tpu_custom_call.1} parent=5 // pred_region
        %s1384 = ssub.s32 %s25, 2
        // Predicated region
        $region122: #{tpu_custom_call.1} parent=120 // pred_check
          %p1385 = pneg %p230
        $region123: #{tpu_custom_call.1} parent=120 // pred_check_branch
          %1387 = sbr.rel (%p1385) target = $region125
        $region124: #{tpu_custom_call.1} parent=120 // pred_region
          %s1388 = sand.u32 %s215, 1
          %s1389 = scalar_lea.sflag [#allocation6], %s1388
          %s1390 = sand.u32 %s215, 1
          %s1391 = smul.addr %s1390, 128
          %s1392 = scalar_lea.vmem [#allocation10], %s1391
          %1393 = dma.done %s1389, 2048
        $region125: #{tpu_custom_call.1} parent=120 // pred_fallthru
          _
        // Predicated region
        $region126: #{tpu_custom_call.1} parent=120 // pred_check
          %p1394 = pneg %p256
        $region127: #{tpu_custom_call.1} parent=120 // pred_check_branch
          %1396 = sbr.rel (%p1394) target = $region129
        $region128: #{tpu_custom_call.1} parent=120 // pred_region
          %s1397 = sand.u32 %s241, 1
          %s1398 = scalar_lea.sflag [#allocation12], %s1397
          %s1399 = sand.u32 %s241, 1
          %s1400 = smul.addr %s1399, 128
          %s1401 = scalar_lea.vmem [#allocation11], %s1400
          %1402 = dma.done %s1398, 2048
        $region129: #{tpu_custom_call.1} parent=120 // pred_fallthru
          _
      $region121: #{tpu_custom_call.1} parent=5 // pred_fallthru
        _
    $region6: #{tpu_custom_call.1} parent=1 // loop_footer
      %s29 = sadd.s32 1, %s25
    $region7: #{tpu_custom_call.1} parent=1 // loop_footer_branch
      %24 = sbr.rel target = $region3
    $region8: #{tpu_custom_call.1} parent=1 // loop_exit
      _
    %1403 = vsyncpa [#allocation5], 1
    %s1404 = scalar_lea.sflag [#allocation5], 1
    %1405 = vsyncpa %s1404, 1
    %1406 = vsyncpa [#allocation8], 1
    %1407 = vsyncpa [#allocation6], 1
    %s1408 = scalar_lea.sflag [#allocation6], 1
    %1409 = vsyncpa %s1408, 1
    %1410 = vsyncpa [#allocation12], 1
    %s1411 = scalar_lea.sflag [#allocation12], 1
    %1412 = vsyncpa %s1411, 1

</llo_original>
